<compile_context>
chip_gen: v6e
topology: v6e:2x2x1
jax: 0.10.0
libtpu: 0.0.40
codegen_flags: <defaults>
</compile_context>

<pallas_src>
import functools

import jax
import jax.numpy as jnp
import numpy as np
from jax import lax
from jax.experimental import pallas as pl
from jax.experimental.pallas import tpu as pltpu

_INV_SQRT2 = 0.7071067811865476


def _gelu(x):
    # exact (erf-based) GELU == torch.nn.GELU() default (approximate='none')
    return 0.5 * x * (1.0 + lax.erf(x * _INV_SQRT2))


def _smol_block_kernel(x_ref, row_ref, col_ref, w1_ref, b1_ref, w2x_ref, w2a_ref,
                       b2_ref, o_ref, *, H, W):
    """One batch element, lane-dense (channels x flat-spatial) layout.

    x_ref  : (1, Cin, H*W)   raw input, channels on sublanes, spatial on lanes
    row_ref: (1, H*W) int32  row index of every flat-spatial position
    col_ref: (1, H*W) int32  column index of every flat-spatial position
    w1_ref : (9, Cmid, Cin)  conv1 weights, tap-major ((kh*3+kw), out, in)
    b1_ref : (Cmid, 1)
    w2x_ref: (Cout, Cin)     grouped-1x1 weights hitting the raw-input channels
    w2a_ref: (Cout, Cmid)    grouped-1x1 weights hitting the gelu(conv1) channels
    b2_ref : (Cout, 1)
    o_ref  : (1, Cout, H*W)
    """
    HW = H * W
    Cmid = w1_ref.shape[1]

    x = x_ref[0]                      # (Cin, HW), f32
    row = row_ref[...]                # (1, HW)
    col = col_ref[...]                # (1, HW)

    # 3x3 conv, stride=1, padding=1: nine masked lane-rolled taps (XLU shifts + VPU
    # masks realize the zero padding), each a small MXU matmul accumulated in f32.
    acc = jnp.zeros((Cmid, HW), jnp.float32)
    for kh in range(3):
        for kw in range(3):
            dh, dw = kh - 1, kw - 1
            delta = dh * W + dw
            shifted = x if delta == 0 else pltpu.roll(x, (-delta) % HW, axis=1)
            mask = None
            if dh != 0:
                mask = (row + dh >= 0) & (row + dh < H)
            if dw != 0:
                mw = (col + dw >= 0) & (col + dw < W)
                mask = mw if mask is None else (mask & mw)
            patch = shifted if mask is None else jnp.where(mask, shifted, 0.0)
            acc = acc + jnp.dot(w1_ref[kh * 3 + kw], patch,
                                preferred_element_type=jnp.float32)

    act = _gelu(acc + b1_ref[...])    # (Cmid, HW)

    # concat([i, gelu(conv1(i))]) followed by the grouped 1x1 conv, expressed without
    # the concat: the (block-diagonal) grouped weights are pre-split into the part that
    # hits the raw input and the part that hits the activation -> two small matmuls.
    out = (jnp.dot(w2x_ref[...], x, preferred_element_type=jnp.float32)
           + jnp.dot(w2a_ref[...], act, preferred_element_type=jnp.float32)
           + b2_ref[...])
    o_ref[0] = _gelu(out).astype(o_ref.dtype)


def smol_block(x_nchw, w1_oihw, b1, w2_grp, b2):
    """Pallas implementation of SmolBlock.forward (stride=1 / dilation=1).

    x_nchw : (N, Cin, H, W)     float32
    w1_oihw: (Cmid, Cin, 3, 3)  conv1 weight (Cmid == Cin)
    b1     : (Cmid,)
    w2_grp : (Cout, ipg, 1, 1)  dwconv weight, groups == Cout, ipg == (Cmid+Cin)//Cout
    b2     : (Cout,)
    returns: (N, Cout, H, W)
    """
    N, Cin, H, W = x_nchw.shape
    Cmid = w1_oihw.shape[0]
    Cout = w2_grp.shape[0]
    ipg = w2_grp.shape[1]
    assert Cmid + Cin == Cout * ipg, "grouped 1x1 conv channel mismatch"
    HW = H * W
    # TODO(synk): for large H*W / C, tile the grid over image rows so the per-step block
    # stays within v7x's smaller (64 MiB) VMEM; at these sizes one image per step fits.

    # NCHW -> (N, Cin, H*W) is a pure reshape (no transpose, no pad, no extra HBM copy).
    x_flat = x_nchw.reshape(N, Cin, HW)

    # conv1 weights, tap-major: w1_taps[kh*3+kw, m, c] = w1_oihw[m, c, kh, kw]
    w1_taps = jnp.transpose(w1_oihw, (2, 3, 0, 1)).reshape(9, Cmid, Cin)

    # Grouped (groups == Cout) 1x1 conv -> block-diagonal dense (Cout, Cmid+Cin) matrix,
    # built vectorized, then split to match torch.cat([i, act], dim=1) channel ordering.
    w2_flat = w2_grp[:, :, 0, 0]                                   # (Cout, ipg)
    eye = jnp.eye(Cout, dtype=w2_flat.dtype)
    w2_dense = (eye[:, :, None] * w2_flat[:, None, :]).reshape(Cout, Cout * ipg)
    w2x = w2_dense[:, :Cin]                                        # (Cout, Cin)
    w2a = w2_dense[:, Cin:]                                        # (Cout, Cmid)

    # Tiny per-position (row, col) index vectors for the in-kernel boundary masks
    # (replaces materializing a zero-padded copy of the whole input in HBM).
    flat = jnp.arange(HW, dtype=jnp.int32)
    row_idx = (flat // W).reshape(1, HW)
    col_idx = (flat % W).reshape(1, HW)

    kernel = functools.partial(_smol_block_kernel, H=H, W=W)

    out_flat = pl.pallas_call(
        kernel,
        out_shape=jax.ShapeDtypeStruct((N, Cout, HW), x_nchw.dtype),
        grid=(N,),
        in_specs=[
            pl.BlockSpec((1, Cin, HW), lambda n: (n, 0, 0)),
            pl.BlockSpec((1, HW), lambda n: (0, 0)),
            pl.BlockSpec((1, HW), lambda n: (0, 0)),
            pl.BlockSpec((9, Cmid, Cin), lambda n: (0, 0, 0)),
            pl.BlockSpec((Cmid, 1), lambda n: (0, 0)),
            pl.BlockSpec((Cout, Cin), lambda n: (0, 0)),
            pl.BlockSpec((Cout, Cmid), lambda n: (0, 0)),
            pl.BlockSpec((Cout, 1), lambda n: (0, 0)),
        ],
        out_specs=pl.BlockSpec((1, Cout, HW), lambda n: (n, 0, 0)),
        compiler_params=pltpu.CompilerParams(
            dimension_semantics=("parallel",)),
    )(x_flat, row_idx, col_idx, w1_taps, b1.reshape(Cmid, 1), w2x, w2a,
      b2.reshape(Cout, 1))

    # (N, Cout, H*W) -> (N, Cout, H, W) is again a pure reshape (no transpose).
    return out_flat.reshape(N, Cout, H, W)


def _gelu_ref(x):
    return 0.5 * x * (1.0 + jax.scipy.special.erf(x * _INV_SQRT2))


def smol_block_ref(x, w1, b1, w2, b2):
    # pure-JAX reference (NCHW, same semantics as the PyTorch module)
    y = lax.conv_general_dilated(
        x, w1, window_strides=(1, 1), padding=((1, 1), (1, 1)),
        dimension_numbers=("NCHW", "OIHW", "NCHW"))
    y = _gelu_ref(y + b1[None, :, None, None])
    cat = jnp.concatenate([x, y], axis=1)
    z = lax.conv_general_dilated(
        cat, w2, window_strides=(1, 1), padding="VALID",
        dimension_numbers=("NCHW", "OIHW", "NCHW"),
        feature_group_count=w2.shape[0])
    return _gelu_ref(z + b2[None, :, None, None])


if __name__ == "__main__":
    N, Cin, H, W = 2, 4, 16, 16
    Cout = 8                      # 2*Cin must be divisible by Cout (groups == Cout)
    Cmid = Cin                    # interim_features = in_channels
    ipg = (Cmid + Cin) // Cout    # input channels per group of dwconv

    key = jax.random.PRNGKey(0)
    k0, k1, k2, k3, k4 = jax.random.split(key, 5)
    x = jax.random.normal(k0, (N, Cin, H, W), jnp.float32)
    w1 = jax.random.normal(k1, (Cmid, Cin, 3, 3), jnp.float32) * 0.2
    b1 = jax.random.normal(k2, (Cmid,), jnp.float32) * 0.1
    w2 = jax.random.normal(k3, (Cout, ipg, 1, 1), jnp.float32) * 0.2
    b2 = jax.random.normal(k4, (Cout,), jnp.float32) * 0.1

    out = smol_block(x, w1, b1, w2, b2)
    out = jax.block_until_ready(out)

    ref = smol_block_ref(x, w1, b1, w2, b2)
    np.testing.assert_allclose(np.asarray(out), np.asarray(ref), rtol=1e-4, atol=1e-4)
    print("KERNEL_OK")
</pallas_src>

<mosaic_0001>
module attributes {stable_mosaic.version = 11 : i64} {
  func.func @_smol_block_kernel(%arg0: i32, %arg1: memref<1x4x256xf32, #tpu.memory_space<vmem>>, %arg2: memref<1x256xi32, #tpu.memory_space<vmem>>, %arg3: memref<1x256xi32, #tpu.memory_space<vmem>>, %arg4: memref<9x4x4xf32, #tpu.memory_space<vmem>>, %arg5: memref<4x1xf32, #tpu.memory_space<vmem>>, %arg6: memref<8x4xf32, #tpu.memory_space<vmem>>, %arg7: memref<8x4xf32, #tpu.memory_space<vmem>>, %arg8: memref<8x1xf32, #tpu.memory_space<vmem>>, %arg9: memref<1x8x256xf32, #tpu.memory_space<vmem>>) attributes {dimension_semantics = [#tpu.dimension_semantics<parallel>], iteration_bounds = array<i64: 2>, scalar_prefetch = 0 : i64, scratch_operands = 0 : i64, tpu.core_type = #tpu.core_type<tc>, window_params = [{transform_indices = @transform_0, window_bounds = array<i64: 1, 4, 256>}, {pipeline_mode = #tpu.pipeline_mode<synchronous>, transform_indices = @transform_1, window_bounds = array<i64: 1, 256>}, {pipeline_mode = #tpu.pipeline_mode<synchronous>, transform_indices = @transform_2, window_bounds = array<i64: 1, 256>}, {pipeline_mode = #tpu.pipeline_mode<synchronous>, transform_indices = @transform_3, window_bounds = array<i64: 9, 4, 4>}, {pipeline_mode = #tpu.pipeline_mode<synchronous>, transform_indices = @transform_4, window_bounds = array<i64: 4, 1>}, {pipeline_mode = #tpu.pipeline_mode<synchronous>, transform_indices = @transform_5, window_bounds = array<i64: 8, 4>}, {pipeline_mode = #tpu.pipeline_mode<synchronous>, transform_indices = @transform_6, window_bounds = array<i64: 8, 4>}, {pipeline_mode = #tpu.pipeline_mode<synchronous>, transform_indices = @transform_7, window_bounds = array<i64: 8, 1>}, {transform_indices = @transform_8, window_bounds = array<i64: 1, 8, 256>}]} {
    %c0 = arith.constant 0 : index
    %c0_0 = arith.constant 0 : index
    %c0_1 = arith.constant 0 : index
    %0 = vector.load %arg1[%c0, %c0_0, %c0_1] : memref<1x4x256xf32, #tpu.memory_space<vmem>>, vector<1x4x256xf32>
    %1 = vector.shape_cast %0 : vector<1x4x256xf32> to vector<4x256xf32>
    %c0_2 = arith.constant 0 : index
    %c0_3 = arith.constant 0 : index
    %2 = vector.load %arg2[%c0_2, %c0_3] : memref<1x256xi32, #tpu.memory_space<vmem>>, vector<1x256xi32>
    %c0_4 = arith.constant 0 : index
    %c0_5 = arith.constant 0 : index
    %3 = vector.load %arg3[%c0_4, %c0_5] : memref<1x256xi32, #tpu.memory_space<vmem>>, vector<1x256xi32>
    %cst = arith.constant 0.000000e+00 : f32
    %4 = vector.broadcast %cst : f32 to vector<4x256xf32>
    %c17_i32 = arith.constant 17 : i32
    %5 = tpu.dynamic_rotate %1 by %c17_i32 dim 1 : vector<4x256xf32>, i32 -> vector<4x256xf32>
    %c-1_i32 = arith.constant -1 : i32
    %6 = vector.broadcast %c-1_i32 : i32 to vector<1x256xi32>
    %7 = arith.addi %2, %6 : vector<1x256xi32>
    %c0_i32 = arith.constant 0 : i32
    %8 = vector.broadcast %c0_i32 : i32 to vector<1x256xi32>
    %9 = arith.cmpi sge, %7, %8 : vector<1x256xi32>
    %c-1_i32_6 = arith.constant -1 : i32
    %10 = vector.broadcast %c-1_i32_6 : i32 to vector<1x256xi32>
    %11 = arith.addi %2, %10 : vector<1x256xi32>
    %c16_i32 = arith.constant 16 : i32
    %12 = vector.broadcast %c16_i32 : i32 to vector<1x256xi32>
    %13 = arith.cmpi slt, %11, %12 : vector<1x256xi32>
    %14 = arith.andi %9, %13 : vector<1x256xi1>
    %c-1_i32_7 = arith.constant -1 : i32
    %15 = vector.broadcast %c-1_i32_7 : i32 to vector<1x256xi32>
    %16 = arith.addi %3, %15 : vector<1x256xi32>
    %c0_i32_8 = arith.constant 0 : i32
    %17 = vector.broadcast %c0_i32_8 : i32 to vector<1x256xi32>
    %18 = arith.cmpi sge, %16, %17 : vector<1x256xi32>
    %c-1_i32_9 = arith.constant -1 : i32
    %19 = vector.broadcast %c-1_i32_9 : i32 to vector<1x256xi32>
    %20 = arith.addi %3, %19 : vector<1x256xi32>
    %c16_i32_10 = arith.constant 16 : i32
    %21 = vector.broadcast %c16_i32_10 : i32 to vector<1x256xi32>
    %22 = arith.cmpi slt, %20, %21 : vector<1x256xi32>
    %23 = arith.andi %18, %22 : vector<1x256xi1>
    %24 = arith.andi %14, %23 : vector<1x256xi1>
    %cst_11 = arith.constant 0.000000e+00 : f32
    %25 = vector.shape_cast %24 : vector<1x256xi1> to vector<1x256xi1>
    %26 = vector.broadcast %25 : vector<1x256xi1> to vector<4x256xi1>
    %27 = vector.broadcast %cst_11 : f32 to vector<4x256xf32>
    %28 = arith.select %26, %5, %27 : vector<4x256xi1>, vector<4x256xf32>
    %c0_12 = arith.constant 0 : index
    %c0_13 = arith.constant 0 : index
    %c0_14 = arith.constant 0 : index
    %29 = vector.load %arg4[%c0_12, %c0_13, %c0_14] : memref<9x4x4xf32, #tpu.memory_space<vmem>>, vector<1x4x4xf32>
    %30 = vector.shape_cast %29 : vector<1x4x4xf32> to vector<4x4xf32>
    %cst_15 = arith.constant dense<0.000000e+00> : vector<4x256xf32>
    %31 = tpu.matmul %30, %28, %cst_15 {dimension_numbers = #tpu.dot_dimension_numbers<[1], [0], [0], [1], [0, 0, 1, 1], [], []>} : vector<4x4xf32>, vector<4x256xf32>, vector<4x256xf32> -> vector<4x256xf32>
    %32 = arith.addf %4, %31 : vector<4x256xf32>
    %c16_i32_16 = arith.constant 16 : i32
    %33 = tpu.dynamic_rotate %1 by %c16_i32_16 dim 1 : vector<4x256xf32>, i32 -> vector<4x256xf32>
    %c-1_i32_17 = arith.constant -1 : i32
    %34 = vector.broadcast %c-1_i32_17 : i32 to vector<1x256xi32>
    %35 = arith.addi %2, %34 : vector<1x256xi32>
    %c0_i32_18 = arith.constant 0 : i32
    %36 = vector.broadcast %c0_i32_18 : i32 to vector<1x256xi32>
    %37 = arith.cmpi sge, %35, %36 : vector<1x256xi32>
    %c-1_i32_19 = arith.constant -1 : i32
    %38 = vector.broadcast %c-1_i32_19 : i32 to vector<1x256xi32>
    %39 = arith.addi %2, %38 : vector<1x256xi32>
    %c16_i32_20 = arith.constant 16 : i32
    %40 = vector.broadcast %c16_i32_20 : i32 to vector<1x256xi32>
    %41 = arith.cmpi slt, %39, %40 : vector<1x256xi32>
    %42 = arith.andi %37, %41 : vector<1x256xi1>
    %cst_21 = arith.constant 0.000000e+00 : f32
    %43 = vector.shape_cast %42 : vector<1x256xi1> to vector<1x256xi1>
    %44 = vector.broadcast %43 : vector<1x256xi1> to vector<4x256xi1>
    %45 = vector.broadcast %cst_21 : f32 to vector<4x256xf32>
    %46 = arith.select %44, %33, %45 : vector<4x256xi1>, vector<4x256xf32>
    %c1 = arith.constant 1 : index
    %c0_22 = arith.constant 0 : index
    %c0_23 = arith.constant 0 : index
    %47 = vector.load %arg4[%c1, %c0_22, %c0_23] : memref<9x4x4xf32, #tpu.memory_space<vmem>>, vector<1x4x4xf32>
    %48 = vector.shape_cast %47 : vector<1x4x4xf32> to vector<4x4xf32>
    %cst_24 = arith.constant dense<0.000000e+00> : vector<4x256xf32>
    %49 = tpu.matmul %48, %46, %cst_24 {dimension_numbers = #tpu.dot_dimension_numbers<[1], [0], [0], [1], [0, 0, 1, 1], [], []>} : vector<4x4xf32>, vector<4x256xf32>, vector<4x256xf32> -> vector<4x256xf32>
    %50 = arith.addf %32, %49 : vector<4x256xf32>
    %c15_i32 = arith.constant 15 : i32
    %51 = tpu.dynamic_rotate %1 by %c15_i32 dim 1 : vector<4x256xf32>, i32 -> vector<4x256xf32>
    %c-1_i32_25 = arith.constant -1 : i32
    %52 = vector.broadcast %c-1_i32_25 : i32 to vector<1x256xi32>
    %53 = arith.addi %2, %52 : vector<1x256xi32>
    %c0_i32_26 = arith.constant 0 : i32
    %54 = vector.broadcast %c0_i32_26 : i32 to vector<1x256xi32>
    %55 = arith.cmpi sge, %53, %54 : vector<1x256xi32>
    %c-1_i32_27 = arith.constant -1 : i32
    %56 = vector.broadcast %c-1_i32_27 : i32 to vector<1x256xi32>
    %57 = arith.addi %2, %56 : vector<1x256xi32>
    %c16_i32_28 = arith.constant 16 : i32
    %58 = vector.broadcast %c16_i32_28 : i32 to vector<1x256xi32>
    %59 = arith.cmpi slt, %57, %58 : vector<1x256xi32>
    %60 = arith.andi %55, %59 : vector<1x256xi1>
    %c1_i32 = arith.constant 1 : i32
    %61 = vector.broadcast %c1_i32 : i32 to vector<1x256xi32>
    %62 = arith.addi %3, %61 : vector<1x256xi32>
    %c0_i32_29 = arith.constant 0 : i32
    %63 = vector.broadcast %c0_i32_29 : i32 to vector<1x256xi32>
    %64 = arith.cmpi sge, %62, %63 : vector<1x256xi32>
    %c1_i32_30 = arith.constant 1 : i32
    %65 = vector.broadcast %c1_i32_30 : i32 to vector<1x256xi32>
    %66 = arith.addi %3, %65 : vector<1x256xi32>
    %c16_i32_31 = arith.constant 16 : i32
    %67 = vector.broadcast %c16_i32_31 : i32 to vector<1x256xi32>
    %68 = arith.cmpi slt, %66, %67 : vector<1x256xi32>
    %69 = arith.andi %64, %68 : vector<1x256xi1>
    %70 = arith.andi %60, %69 : vector<1x256xi1>
    %cst_32 = arith.constant 0.000000e+00 : f32
    %71 = vector.shape_cast %70 : vector<1x256xi1> to vector<1x256xi1>
    %72 = vector.broadcast %71 : vector<1x256xi1> to vector<4x256xi1>
    %73 = vector.broadcast %cst_32 : f32 to vector<4x256xf32>
    %74 = arith.select %72, %51, %73 : vector<4x256xi1>, vector<4x256xf32>
    %c2 = arith.constant 2 : index
    %c0_33 = arith.constant 0 : index
    %c0_34 = arith.constant 0 : index
    %75 = vector.load %arg4[%c2, %c0_33, %c0_34] : memref<9x4x4xf32, #tpu.memory_space<vmem>>, vector<1x4x4xf32>
    %76 = vector.shape_cast %75 : vector<1x4x4xf32> to vector<4x4xf32>
    %cst_35 = arith.constant dense<0.000000e+00> : vector<4x256xf32>
    %77 = tpu.matmul %76, %74, %cst_35 {dimension_numbers = #tpu.dot_dimension_numbers<[1], [0], [0], [1], [0, 0, 1, 1], [], []>} : vector<4x4xf32>, vector<4x256xf32>, vector<4x256xf32> -> vector<4x256xf32>
    %78 = arith.addf %50, %77 : vector<4x256xf32>
    %c1_i32_36 = arith.constant 1 : i32
    %79 = tpu.dynamic_rotate %1 by %c1_i32_36 dim 1 : vector<4x256xf32>, i32 -> vector<4x256xf32>
    %c-1_i32_37 = arith.constant -1 : i32
    %80 = vector.broadcast %c-1_i32_37 : i32 to vector<1x256xi32>
    %81 = arith.addi %3, %80 : vector<1x256xi32>
    %c0_i32_38 = arith.constant 0 : i32
    %82 = vector.broadcast %c0_i32_38 : i32 to vector<1x256xi32>
    %83 = arith.cmpi sge, %81, %82 : vector<1x256xi32>
    %c-1_i32_39 = arith.constant -1 : i32
    %84 = vector.broadcast %c-1_i32_39 : i32 to vector<1x256xi32>
    %85 = arith.addi %3, %84 : vector<1x256xi32>
    %c16_i32_40 = arith.constant 16 : i32
    %86 = vector.broadcast %c16_i32_40 : i32 to vector<1x256xi32>
    %87 = arith.cmpi slt, %85, %86 : vector<1x256xi32>
    %88 = arith.andi %83, %87 : vector<1x256xi1>
    %cst_41 = arith.constant 0.000000e+00 : f32
    %89 = vector.shape_cast %88 : vector<1x256xi1> to vector<1x256xi1>
    %90 = vector.broadcast %89 : vector<1x256xi1> to vector<4x256xi1>
    %91 = vector.broadcast %cst_41 : f32 to vector<4x256xf32>
    %92 = arith.select %90, %79, %91 : vector<4x256xi1>, vector<4x256xf32>
    %c3 = arith.constant 3 : index
    %c0_42 = arith.constant 0 : index
    %c0_43 = arith.constant 0 : index
    %93 = vector.load %arg4[%c3, %c0_42, %c0_43] : memref<9x4x4xf32, #tpu.memory_space<vmem>>, vector<1x4x4xf32>
    %94 = vector.shape_cast %93 : vector<1x4x4xf32> to vector<4x4xf32>
    %cst_44 = arith.constant dense<0.000000e+00> : vector<4x256xf32>
    %95 = tpu.matmul %94, %92, %cst_44 {dimension_numbers = #tpu.dot_dimension_numbers<[1], [0], [0], [1], [0, 0, 1, 1], [], []>} : vector<4x4xf32>, vector<4x256xf32>, vector<4x256xf32> -> vector<4x256xf32>
    %96 = arith.addf %78, %95 : vector<4x256xf32>
    %c4 = arith.constant 4 : index
    %c0_45 = arith.constant 0 : index
    %c0_46 = arith.constant 0 : index
    %97 = vector.load %arg4[%c4, %c0_45, %c0_46] : memref<9x4x4xf32, #tpu.memory_space<vmem>>, vector<1x4x4xf32>
    %98 = vector.shape_cast %97 : vector<1x4x4xf32> to vector<4x4xf32>
    %cst_47 = arith.constant dense<0.000000e+00> : vector<4x256xf32>
    %99 = tpu.matmul %98, %1, %cst_47 {dimension_numbers = #tpu.dot_dimension_numbers<[1], [0], [0], [1], [0, 0, 1, 1], [], []>} : vector<4x4xf32>, vector<4x256xf32>, vector<4x256xf32> -> vector<4x256xf32>
    %100 = arith.addf %96, %99 : vector<4x256xf32>
    %c255_i32 = arith.constant 255 : i32
    %101 = tpu.dynamic_rotate %1 by %c255_i32 dim 1 : vector<4x256xf32>, i32 -> vector<4x256xf32>
    %c1_i32_48 = arith.constant 1 : i32
    %102 = vector.broadcast %c1_i32_48 : i32 to vector<1x256xi32>
    %103 = arith.addi %3, %102 : vector<1x256xi32>
    %c0_i32_49 = arith.constant 0 : i32
    %104 = vector.broadcast %c0_i32_49 : i32 to vector<1x256xi32>
    %105 = arith.cmpi sge, %103, %104 : vector<1x256xi32>
    %c1_i32_50 = arith.constant 1 : i32
    %106 = vector.broadcast %c1_i32_50 : i32 to vector<1x256xi32>
    %107 = arith.addi %3, %106 : vector<1x256xi32>
    %c16_i32_51 = arith.constant 16 : i32
    %108 = vector.broadcast %c16_i32_51 : i32 to vector<1x256xi32>
    %109 = arith.cmpi slt, %107, %108 : vector<1x256xi32>
    %110 = arith.andi %105, %109 : vector<1x256xi1>
    %cst_52 = arith.constant 0.000000e+00 : f32
    %111 = vector.shape_cast %110 : vector<1x256xi1> to vector<1x256xi1>
    %112 = vector.broadcast %111 : vector<1x256xi1> to vector<4x256xi1>
    %113 = vector.broadcast %cst_52 : f32 to vector<4x256xf32>
    %114 = arith.select %112, %101, %113 : vector<4x256xi1>, vector<4x256xf32>
    %c5 = arith.constant 5 : index
    %c0_53 = arith.constant 0 : index
    %c0_54 = arith.constant 0 : index
    %115 = vector.load %arg4[%c5, %c0_53, %c0_54] : memref<9x4x4xf32, #tpu.memory_space<vmem>>, vector<1x4x4xf32>
    %116 = vector.shape_cast %115 : vector<1x4x4xf32> to vector<4x4xf32>
    %cst_55 = arith.constant dense<0.000000e+00> : vector<4x256xf32>
    %117 = tpu.matmul %116, %114, %cst_55 {dimension_numbers = #tpu.dot_dimension_numbers<[1], [0], [0], [1], [0, 0, 1, 1], [], []>} : vector<4x4xf32>, vector<4x256xf32>, vector<4x256xf32> -> vector<4x256xf32>
    %118 = arith.addf %100, %117 : vector<4x256xf32>
    %c241_i32 = arith.constant 241 : i32
    %119 = tpu.dynamic_rotate %1 by %c241_i32 dim 1 : vector<4x256xf32>, i32 -> vector<4x256xf32>
    %c1_i32_56 = arith.constant 1 : i32
    %120 = vector.broadcast %c1_i32_56 : i32 to vector<1x256xi32>
    %121 = arith.addi %2, %120 : vector<1x256xi32>
    %c0_i32_57 = arith.constant 0 : i32
    %122 = vector.broadcast %c0_i32_57 : i32 to vector<1x256xi32>
    %123 = arith.cmpi sge, %121, %122 : vector<1x256xi32>
    %c1_i32_58 = arith.constant 1 : i32
    %124 = vector.broadcast %c1_i32_58 : i32 to vector<1x256xi32>
    %125 = arith.addi %2, %124 : vector<1x256xi32>
    %c16_i32_59 = arith.constant 16 : i32
    %126 = vector.broadcast %c16_i32_59 : i32 to vector<1x256xi32>
    %127 = arith.cmpi slt, %125, %126 : vector<1x256xi32>
    %128 = arith.andi %123, %127 : vector<1x256xi1>
    %c-1_i32_60 = arith.constant -1 : i32
    %129 = vector.broadcast %c-1_i32_60 : i32 to vector<1x256xi32>
    %130 = arith.addi %3, %129 : vector<1x256xi32>
    %c0_i32_61 = arith.constant 0 : i32
    %131 = vector.broadcast %c0_i32_61 : i32 to vector<1x256xi32>
    %132 = arith.cmpi sge, %130, %131 : vector<1x256xi32>
    %c-1_i32_62 = arith.constant -1 : i32
    %133 = vector.broadcast %c-1_i32_62 : i32 to vector<1x256xi32>
    %134 = arith.addi %3, %133 : vector<1x256xi32>
    %c16_i32_63 = arith.constant 16 : i32
    %135 = vector.broadcast %c16_i32_63 : i32 to vector<1x256xi32>
    %136 = arith.cmpi slt, %134, %135 : vector<1x256xi32>
    %137 = arith.andi %132, %136 : vector<1x256xi1>
    %138 = arith.andi %128, %137 : vector<1x256xi1>
    %cst_64 = arith.constant 0.000000e+00 : f32
    %139 = vector.shape_cast %138 : vector<1x256xi1> to vector<1x256xi1>
    %140 = vector.broadcast %139 : vector<1x256xi1> to vector<4x256xi1>
    %141 = vector.broadcast %cst_64 : f32 to vector<4x256xf32>
    %142 = arith.select %140, %119, %141 : vector<4x256xi1>, vector<4x256xf32>
    %c6 = arith.constant 6 : index
    %c0_65 = arith.constant 0 : index
    %c0_66 = arith.constant 0 : index
    %143 = vector.load %arg4[%c6, %c0_65, %c0_66] : memref<9x4x4xf32, #tpu.memory_space<vmem>>, vector<1x4x4xf32>
    %144 = vector.shape_cast %143 : vector<1x4x4xf32> to vector<4x4xf32>
    %cst_67 = arith.constant dense<0.000000e+00> : vector<4x256xf32>
    %145 = tpu.matmul %144, %142, %cst_67 {dimension_numbers = #tpu.dot_dimension_numbers<[1], [0], [0], [1], [0, 0, 1, 1], [], []>} : vector<4x4xf32>, vector<4x256xf32>, vector<4x256xf32> -> vector<4x256xf32>
    %146 = arith.addf %118, %145 : vector<4x256xf32>
    %c240_i32 = arith.constant 240 : i32
    %147 = tpu.dynamic_rotate %1 by %c240_i32 dim 1 : vector<4x256xf32>, i32 -> vector<4x256xf32>
    %c1_i32_68 = arith.constant 1 : i32
    %148 = vector.broadcast %c1_i32_68 : i32 to vector<1x256xi32>
    %149 = arith.addi %2, %148 : vector<1x256xi32>
    %c0_i32_69 = arith.constant 0 : i32
    %150 = vector.broadcast %c0_i32_69 : i32 to vector<1x256xi32>
    %151 = arith.cmpi sge, %149, %150 : vector<1x256xi32>
    %c1_i32_70 = arith.constant 1 : i32
    %152 = vector.broadcast %c1_i32_70 : i32 to vector<1x256xi32>
    %153 = arith.addi %2, %152 : vector<1x256xi32>
    %c16_i32_71 = arith.constant 16 : i32
    %154 = vector.broadcast %c16_i32_71 : i32 to vector<1x256xi32>
    %155 = arith.cmpi slt, %153, %154 : vector<1x256xi32>
    %156 = arith.andi %151, %155 : vector<1x256xi1>
    %cst_72 = arith.constant 0.000000e+00 : f32
    %157 = vector.shape_cast %156 : vector<1x256xi1> to vector<1x256xi1>
    %158 = vector.broadcast %157 : vector<1x256xi1> to vector<4x256xi1>
    %159 = vector.broadcast %cst_72 : f32 to vector<4x256xf32>
    %160 = arith.select %158, %147, %159 : vector<4x256xi1>, vector<4x256xf32>
    %c7 = arith.constant 7 : index
    %c0_73 = arith.constant 0 : index
    %c0_74 = arith.constant 0 : index
    %161 = vector.load %arg4[%c7, %c0_73, %c0_74] : memref<9x4x4xf32, #tpu.memory_space<vmem>>, vector<1x4x4xf32>
    %162 = vector.shape_cast %161 : vector<1x4x4xf32> to vector<4x4xf32>
    %cst_75 = arith.constant dense<0.000000e+00> : vector<4x256xf32>
    %163 = tpu.matmul %162, %160, %cst_75 {dimension_numbers = #tpu.dot_dimension_numbers<[1], [0], [0], [1], [0, 0, 1, 1], [], []>} : vector<4x4xf32>, vector<4x256xf32>, vector<4x256xf32> -> vector<4x256xf32>
    %164 = arith.addf %146, %163 : vector<4x256xf32>
    %c239_i32 = arith.constant 239 : i32
    %165 = tpu.dynamic_rotate %1 by %c239_i32 dim 1 : vector<4x256xf32>, i32 -> vector<4x256xf32>
    %c1_i32_76 = arith.constant 1 : i32
    %166 = vector.broadcast %c1_i32_76 : i32 to vector<1x256xi32>
    %167 = arith.addi %2, %166 : vector<1x256xi32>
    %c0_i32_77 = arith.constant 0 : i32
    %168 = vector.broadcast %c0_i32_77 : i32 to vector<1x256xi32>
    %169 = arith.cmpi sge, %167, %168 : vector<1x256xi32>
    %c1_i32_78 = arith.constant 1 : i32
    %170 = vector.broadcast %c1_i32_78 : i32 to vector<1x256xi32>
    %171 = arith.addi %2, %170 : vector<1x256xi32>
    %c16_i32_79 = arith.constant 16 : i32
    %172 = vector.broadcast %c16_i32_79 : i32 to vector<1x256xi32>
    %173 = arith.cmpi slt, %171, %172 : vector<1x256xi32>
    %174 = arith.andi %169, %173 : vector<1x256xi1>
    %c1_i32_80 = arith.constant 1 : i32
    %175 = vector.broadcast %c1_i32_80 : i32 to vector<1x256xi32>
    %176 = arith.addi %3, %175 : vector<1x256xi32>
    %c0_i32_81 = arith.constant 0 : i32
    %177 = vector.broadcast %c0_i32_81 : i32 to vector<1x256xi32>
    %178 = arith.cmpi sge, %176, %177 : vector<1x256xi32>
    %c1_i32_82 = arith.constant 1 : i32
    %179 = vector.broadcast %c1_i32_82 : i32 to vector<1x256xi32>
    %180 = arith.addi %3, %179 : vector<1x256xi32>
    %c16_i32_83 = arith.constant 16 : i32
    %181 = vector.broadcast %c16_i32_83 : i32 to vector<1x256xi32>
    %182 = arith.cmpi slt, %180, %181 : vector<1x256xi32>
    %183 = arith.andi %178, %182 : vector<1x256xi1>
    %184 = arith.andi %174, %183 : vector<1x256xi1>
    %cst_84 = arith.constant 0.000000e+00 : f32
    %185 = vector.shape_cast %184 : vector<1x256xi1> to vector<1x256xi1>
    %186 = vector.broadcast %185 : vector<1x256xi1> to vector<4x256xi1>
    %187 = vector.broadcast %cst_84 : f32 to vector<4x256xf32>
    %188 = arith.select %186, %165, %187 : vector<4x256xi1>, vector<4x256xf32>
    %c8 = arith.constant 8 : index
    %c0_85 = arith.constant 0 : index
    %c0_86 = arith.constant 0 : index
    %189 = vector.load %arg4[%c8, %c0_85, %c0_86] : memref<9x4x4xf32, #tpu.memory_space<vmem>>, vector<1x4x4xf32>
    %190 = vector.shape_cast %189 : vector<1x4x4xf32> to vector<4x4xf32>
    %cst_87 = arith.constant dense<0.000000e+00> : vector<4x256xf32>
    %191 = tpu.matmul %190, %188, %cst_87 {dimension_numbers = #tpu.dot_dimension_numbers<[1], [0], [0], [1], [0, 0, 1, 1], [], []>} : vector<4x4xf32>, vector<4x256xf32>, vector<4x256xf32> -> vector<4x256xf32>
    %192 = arith.addf %164, %191 : vector<4x256xf32>
    %c0_88 = arith.constant 0 : index
    %c0_89 = arith.constant 0 : index
    %193 = vector.load %arg5[%c0_88, %c0_89] : memref<4x1xf32, #tpu.memory_space<vmem>>, vector<4x1xf32>
    %194 = vector.broadcast %193 : vector<4x1xf32> to vector<4x256xf32>
    %195 = arith.addf %192, %194 : vector<4x256xf32>
    %cst_90 = arith.constant 5.000000e-01 : f32
    %196 = vector.broadcast %cst_90 : f32 to vector<4x256xf32>
    %197 = arith.mulf %196, %195 : vector<4x256xf32>
    %cst_91 = arith.constant 0.707106769 : f32
    %198 = vector.broadcast %cst_91 : f32 to vector<4x256xf32>
    %199 = arith.mulf %195, %198 : vector<4x256xf32>
    %200 = math.erf %199 : vector<4x256xf32>
    %cst_92 = arith.constant 1.000000e+00 : f32
    %201 = vector.broadcast %cst_92 : f32 to vector<4x256xf32>
    %202 = arith.addf %201, %200 : vector<4x256xf32>
    %203 = arith.mulf %197, %202 : vector<4x256xf32>
    %c0_93 = arith.constant 0 : index
    %c0_94 = arith.constant 0 : index
    %204 = vector.load %arg6[%c0_93, %c0_94] : memref<8x4xf32, #tpu.memory_space<vmem>>, vector<8x4xf32>
    %cst_95 = arith.constant dense<0.000000e+00> : vector<8x256xf32>
    %205 = tpu.matmul %204, %1, %cst_95 {dimension_numbers = #tpu.dot_dimension_numbers<[1], [0], [0], [1], [0, 0, 1, 1], [], []>} : vector<8x4xf32>, vector<4x256xf32>, vector<8x256xf32> -> vector<8x256xf32>
    %c0_96 = arith.constant 0 : index
    %c0_97 = arith.constant 0 : index
    %206 = vector.load %arg7[%c0_96, %c0_97] : memref<8x4xf32, #tpu.memory_space<vmem>>, vector<8x4xf32>
    %cst_98 = arith.constant dense<0.000000e+00> : vector<8x256xf32>
    %207 = tpu.matmul %206, %203, %cst_98 {dimension_numbers = #tpu.dot_dimension_numbers<[1], [0], [0], [1], [0, 0, 1, 1], [], []>} : vector<8x4xf32>, vector<4x256xf32>, vector<8x256xf32> -> vector<8x256xf32>
    %208 = arith.addf %205, %207 : vector<8x256xf32>
    %c0_99 = arith.constant 0 : index
    %c0_100 = arith.constant 0 : index
    %209 = vector.load %arg8[%c0_99, %c0_100] : memref<8x1xf32, #tpu.memory_space<vmem>>, vector<8x1xf32>
    %210 = vector.broadcast %209 : vector<8x1xf32> to vector<8x256xf32>
    %211 = arith.addf %208, %210 : vector<8x256xf32>
    %cst_101 = arith.constant 5.000000e-01 : f32
    %212 = vector.broadcast %cst_101 : f32 to vector<8x256xf32>
    %213 = arith.mulf %212, %211 : vector<8x256xf32>
    %cst_102 = arith.constant 0.707106769 : f32
    %214 = vector.broadcast %cst_102 : f32 to vector<8x256xf32>
    %215 = arith.mulf %211, %214 : vector<8x256xf32>
    %216 = math.erf %215 : vector<8x256xf32>
    %cst_103 = arith.constant 1.000000e+00 : f32
    %217 = vector.broadcast %cst_103 : f32 to vector<8x256xf32>
    %218 = arith.addf %217, %216 : vector<8x256xf32>
    %219 = arith.mulf %213, %218 : vector<8x256xf32>
    %c0_104 = arith.constant 0 : index
    %c0_105 = arith.constant 0 : index
    %c0_106 = arith.constant 0 : index
    %220 = vector.load %arg9[%c0_104, %c0_105, %c0_106] : memref<1x8x256xf32, #tpu.memory_space<vmem>>, vector<1x8x256xf32>
    %221 = vector.shape_cast %220 : vector<1x8x256xf32> to vector<8x256xf32>
    %222 = vector.shape_cast %219 : vector<8x256xf32> to vector<1x8x256xf32>
    tpu.vector_store %arg9[%c0_104, %c0_105, %c0_106], %222 {strides = array<i32>} : memref<1x8x256xf32, #tpu.memory_space<vmem>>, vector<1x8x256xf32>,
    return
  }
  func.func @transform_0(%arg0: i32) -> (i32, i32, i32) {
    %c0_i32 = arith.constant 0 : i32
    %c0_i32_0 = arith.constant 0 : i32
    %c0_i32_1 = arith.constant 0 : i32
    return %arg0, %c0_i32, %c0_i32_0 : i32, i32, i32
  }
  func.func @transform_1(%arg0: i32) -> (i32, i32) {
    %c0_i32 = arith.constant 0 : i32
    %c0_i32_0 = arith.constant 0 : i32
    %c0_i32_1 = arith.constant 0 : i32
    return %c0_i32, %c0_i32_0 : i32, i32
  }
  func.func @transform_2(%arg0: i32) -> (i32, i32) {
    %c0_i32 = arith.constant 0 : i32
    %c0_i32_0 = arith.constant 0 : i32
    %c0_i32_1 = arith.constant 0 : i32
    return %c0_i32, %c0_i32_0 : i32, i32
  }
  func.func @transform_3(%arg0: i32) -> (i32, i32, i32) {
    %c0_i32 = arith.constant 0 : i32
    %c0_i32_0 = arith.constant 0 : i32
    %c0_i32_1 = arith.constant 0 : i32
    %c0_i32_2 = arith.constant 0 : i32
    return %c0_i32, %c0_i32_0, %c0_i32_1 : i32, i32, i32
  }
  func.func @transform_4(%arg0: i32) -> (i32, i32) {
    %c0_i32 = arith.constant 0 : i32
    %c0_i32_0 = arith.constant 0 : i32
    %c0_i32_1 = arith.constant 0 : i32
    return %c0_i32, %c0_i32_0 : i32, i32
  }
  func.func @transform_5(%arg0: i32) -> (i32, i32) {
    %c0_i32 = arith.constant 0 : i32
    %c0_i32_0 = arith.constant 0 : i32
    %c0_i32_1 = arith.constant 0 : i32
    return %c0_i32, %c0_i32_0 : i32, i32
  }
  func.func @transform_6(%arg0: i32) -> (i32, i32) {
    %c0_i32 = arith.constant 0 : i32
    %c0_i32_0 = arith.constant 0 : i32
    %c0_i32_1 = arith.constant 0 : i32
    return %c0_i32, %c0_i32_0 : i32, i32
  }
  func.func @transform_7(%arg0: i32) -> (i32, i32) {
    %c0_i32 = arith.constant 0 : i32
    %c0_i32_0 = arith.constant 0 : i32
    %c0_i32_1 = arith.constant 0 : i32
    return %c0_i32, %c0_i32_0 : i32, i32
  }
  func.func @transform_8(%arg0: i32) -> (i32, i32, i32) {
    %c0_i32 = arith.constant 0 : i32
    %c0_i32_0 = arith.constant 0 : i32
    %c0_i32_1 = arith.constant 0 : i32
    return %arg0, %c0_i32, %c0_i32_0 : i32, i32, i32
  }
}

</mosaic_0001>

<llo_original>
// kernel: tpu_custom_call.1
$region0: #{tpu_custom_call.1}
  #allocation0 [shape = 'u32[]', space=smem, size = 0x4, offset = 0x4, fixed_abs, tag = 'smem constant byte address 0x4 - core index']
  #allocation1 [shape = 'u32[144,128]{1,0:T(1,128)}', space=vmem, size = 0x12000, scoped, tag = 'internal scratch']
  %s0 = inlined_call_operand.vmem [shape: f32[2,4,256], index: 0, kind: input, shape index: {}]
  %s1 = inlined_call_operand.vmem [shape: s32[1,256], index: 1, kind: input, shape index: {}]
  %s2 = inlined_call_operand.vmem [shape: s32[1,256], index: 2, kind: input, shape index: {}]
  %s3 = inlined_call_operand.vmem [shape: f32[9,4,4], index: 3, kind: input, shape index: {}]
  %s4 = inlined_call_operand.vmem [shape: f32[4,1], index: 4, kind: input, shape index: {}]
  %s5 = inlined_call_operand.vmem [shape: f32[8,4], index: 5, kind: input, shape index: {}]
  %s6 = inlined_call_operand.vmem [shape: f32[8,4], index: 6, kind: input, shape index: {}]
  %s7 = inlined_call_operand.vmem [shape: f32[8,1], index: 7, kind: input, shape index: {}]
  %s8 = inlined_call_operand.hbm [shape: f32[2,8,256], index: 8, kind: output, shape index: {}]
  %s9 = sld [smem:[#allocation0]]
  $region65: #{tpu_custom_call.1} parent=0
    _
  %s11 = ssub.s32 1, %s9
  %s12 = scalar_select 0, %s11, %s9
  $region1: #{tpu_custom_call.1} parent=0
    #allocation2 [shape = 'u8[16384]{0}', space=vmem, size = 0x4000, scoped, tag = 'output window, operand 0']
    #allocation3 [shape = 's32[2]{0}', space=sflag, size = 0x8, scoped, tag = 'scoped memory for tpu_custom_call.1']
    %13 = vsyncpa [#allocation3], 0
    %s14 = scalar_lea.sflag [#allocation3], 1
    %15 = vsyncpa %s14, 0
    loop: start=0, step=1, limit=4
    $region2: #{tpu_custom_call.1} parent=1 // loop_pre_header
      _
    $region3: #{tpu_custom_call.1} parent=1 // loop_header
      %s17 = sphi 0, %s21
      %p18 = scmp.ge.s32.totalorder %s17, 4
      %s27 = sphi 0, %s29
      %s30 = sphi 0, %s27
      %s31 = sphi 0, %s30
      %s47 = sphi 0, %s31
      %s51 = sphi 0, %s51
      %s53 = sphi 0, %s51
      %s54 = sphi 0, %s53
      %s68 = sphi 0, %s54
      %s72 = sphi 0, %s72
      %s74 = sphi 0, %s72
      %s75 = sphi 0, %s74
      %s89 = sphi 0, %s75
      %s93 = sphi 0, %s93
      %s95 = sphi 0, %s93
      %s96 = sphi 0, %s95
      %s110 = sphi 0, %s96
      %s114 = sphi 0, %s114
      %s116 = sphi 0, %s114
      %s117 = sphi 0, %s116
      %s131 = sphi 0, %s117
      %s135 = sphi 0, %s135
      %s137 = sphi 0, %s135
      %s138 = sphi 0, %s137
      %s152 = sphi 0, %s138
      %s156 = sphi 0, %s156
      %s158 = sphi 0, %s156
      %s159 = sphi 0, %s158
      %s173 = sphi 0, %s159
      %s177 = sphi 0, %s177
      %s179 = sphi 0, %s177
      %s180 = sphi 0, %s179
      %s194 = sphi 0, %s180
      %s200 = sphi 0, %s202
      %s203 = sphi 0, %s200
      %s204 = sphi 0, %s203
      %s220 = sphi 0, %s204
    $region4: #{tpu_custom_call.1} parent=1 // loop_header_branch
      %20 = sbr.rel (%p18) target = $region8
    $region5: #{tpu_custom_call.1} parent=1 // loop_body
      %s22 = ssub.s32 %s17, 1
      %s23 = ssub.s32 %s17, 2
      %s24 = sadd.s32 %s17, 1
      %s25 = ssub.s32 %s17, %s24
      %p26 = scmp.eq.s32.totalorder %s25, 0
      %s28 = sadd.s32 %s27, 1
      %s29 = scalar_select %p26, %s27, %s28
      %p32 = pneg %p26
      %p33 = scmp.eq.s32.totalorder %s17, 1
      %p34 = por %p32, %p33
      %p35 = scmp.ne.s32.totalorder %s27, %s30
      %p36 = scmp.eq.s32.totalorder %s17, 0
      %p37 = por %p35, %p36
      %p38 = scmp.ne.s32.totalorder %s27, %s30
      %p39 = scmp.eq.s32.totalorder %s22, 1
      %p40 = por %p38, %p39
      %p41 = scmp.ne.s32.totalorder %s30, %s31
      %p42 = scmp.eq.s32.totalorder %s22, 0
      %p43 = por %p41, %p42
      %p44 = scmp.ne.s32.totalorder %s30, %s31
      %p45 = scmp.eq.s32.totalorder %s23, 1
      %p46 = por %p44, %p45
      %p48 = scmp.ne.s32.totalorder %s31, %s47
      %p49 = scmp.eq.s32.totalorder %s23, 0
      %p50 = por %p48, %p49
      %s52 = sadd.s32 %s51, 1
      %p55 = scmp.eq.s32.totalorder %s17, 1
      %p56 = scmp.ne.s32.totalorder %s51, %s53
      %p57 = scmp.eq.s32.totalorder %s17, 0
      %p58 = por %p56, %p57
      %p59 = scmp.ne.s32.totalorder %s51, %s53
      %p60 = scmp.eq.s32.totalorder %s22, 1
      %p61 = por %p59, %p60
      %p62 = scmp.ne.s32.totalorder %s53, %s54
      %p63 = scmp.eq.s32.totalorder %s22, 0
      %p64 = por %p62, %p63
      %p65 = scmp.ne.s32.totalorder %s53, %s54
      %p66 = scmp.eq.s32.totalorder %s23, 1
      %p67 = por %p65, %p66
      %p69 = scmp.ne.s32.totalorder %s54, %s68
      %p70 = scmp.eq.s32.totalorder %s23, 0
      %p71 = por %p69, %p70
      %s73 = sadd.s32 %s72, 1
      %p76 = scmp.eq.s32.totalorder %s17, 1
      %p77 = scmp.ne.s32.totalorder %s72, %s74
      %p78 = scmp.eq.s32.totalorder %s17, 0
      %p79 = por %p77, %p78
      %p80 = scmp.ne.s32.totalorder %s72, %s74
      %p81 = scmp.eq.s32.totalorder %s22, 1
      %p82 = por %p80, %p81
      %p83 = scmp.ne.s32.totalorder %s74, %s75
      %p84 = scmp.eq.s32.totalorder %s22, 0
      %p85 = por %p83, %p84
      %p86 = scmp.ne.s32.totalorder %s74, %s75
      %p87 = scmp.eq.s32.totalorder %s23, 1
      %p88 = por %p86, %p87
      %p90 = scmp.ne.s32.totalorder %s75, %s89
      %p91 = scmp.eq.s32.totalorder %s23, 0
      %p92 = por %p90, %p91
      %s94 = sadd.s32 %s93, 1
      %p97 = scmp.eq.s32.totalorder %s17, 1
      %p98 = scmp.ne.s32.totalorder %s93, %s95
      %p99 = scmp.eq.s32.totalorder %s17, 0
      %p100 = por %p98, %p99
      %p101 = scmp.ne.s32.totalorder %s93, %s95
      %p102 = scmp.eq.s32.totalorder %s22, 1
      %p103 = por %p101, %p102
      %p104 = scmp.ne.s32.totalorder %s95, %s96
      %p105 = scmp.eq.s32.totalorder %s22, 0
      %p106 = por %p104, %p105
      %p107 = scmp.ne.s32.totalorder %s95, %s96
      %p108 = scmp.eq.s32.totalorder %s23, 1
      %p109 = por %p107, %p108
      %p111 = scmp.ne.s32.totalorder %s96, %s110
      %p112 = scmp.eq.s32.totalorder %s23, 0
      %p113 = por %p111, %p112
      %s115 = sadd.s32 %s114, 1
      %p118 = scmp.eq.s32.totalorder %s17, 1
      %p119 = scmp.ne.s32.totalorder %s114, %s116
      %p120 = scmp.eq.s32.totalorder %s17, 0
      %p121 = por %p119, %p120
      %p122 = scmp.ne.s32.totalorder %s114, %s116
      %p123 = scmp.eq.s32.totalorder %s22, 1
      %p124 = por %p122, %p123
      %p125 = scmp.ne.s32.totalorder %s116, %s117
      %p126 = scmp.eq.s32.totalorder %s22, 0
      %p127 = por %p125, %p126
      %p128 = scmp.ne.s32.totalorder %s116, %s117
      %p129 = scmp.eq.s32.totalorder %s23, 1
      %p130 = por %p128, %p129
      %p132 = scmp.ne.s32.totalorder %s117, %s131
      %p133 = scmp.eq.s32.totalorder %s23, 0
      %p134 = por %p132, %p133
      %s136 = sadd.s32 %s135, 1
      %p139 = scmp.eq.s32.totalorder %s17, 1
      %p140 = scmp.ne.s32.totalorder %s135, %s137
      %p141 = scmp.eq.s32.totalorder %s17, 0
      %p142 = por %p140, %p141
      %p143 = scmp.ne.s32.totalorder %s135, %s137
      %p144 = scmp.eq.s32.totalorder %s22, 1
      %p145 = por %p143, %p144
      %p146 = scmp.ne.s32.totalorder %s137, %s138
      %p147 = scmp.eq.s32.totalorder %s22, 0
      %p148 = por %p146, %p147
      %p149 = scmp.ne.s32.totalorder %s137, %s138
      %p150 = scmp.eq.s32.totalorder %s23, 1
      %p151 = por %p149, %p150
      %p153 = scmp.ne.s32.totalorder %s138, %s152
      %p154 = scmp.eq.s32.totalorder %s23, 0
      %p155 = por %p153, %p154
      %s157 = sadd.s32 %s156, 1
      %p160 = scmp.eq.s32.totalorder %s17, 1
      %p161 = scmp.ne.s32.totalorder %s156, %s158
      %p162 = scmp.eq.s32.totalorder %s17, 0
      %p163 = por %p161, %p162
      %p164 = scmp.ne.s32.totalorder %s156, %s158
      %p165 = scmp.eq.s32.totalorder %s22, 1
      %p166 = por %p164, %p165
      %p167 = scmp.ne.s32.totalorder %s158, %s159
      %p168 = scmp.eq.s32.totalorder %s22, 0
      %p169 = por %p167, %p168
      %p170 = scmp.ne.s32.totalorder %s158, %s159
      %p171 = scmp.eq.s32.totalorder %s23, 1
      %p172 = por %p170, %p171
      %p174 = scmp.ne.s32.totalorder %s159, %s173
      %p175 = scmp.eq.s32.totalorder %s23, 0
      %p176 = por %p174, %p175
      %s178 = sadd.s32 %s177, 1
      %p181 = scmp.eq.s32.totalorder %s17, 1
      %p182 = scmp.ne.s32.totalorder %s177, %s179
      %p183 = scmp.eq.s32.totalorder %s17, 0
      %p184 = por %p182, %p183
      %p185 = scmp.ne.s32.totalorder %s177, %s179
      %p186 = scmp.eq.s32.totalorder %s22, 1
      %p187 = por %p185, %p186
      %p188 = scmp.ne.s32.totalorder %s179, %s180
      %p189 = scmp.eq.s32.totalorder %s22, 0
      %p190 = por %p188, %p189
      %p191 = scmp.ne.s32.totalorder %s179, %s180
      %p192 = scmp.eq.s32.totalorder %s23, 1
      %p193 = por %p191, %p192
      %p195 = scmp.ne.s32.totalorder %s180, %s194
      %p196 = scmp.eq.s32.totalorder %s23, 0
      %p197 = por %p195, %p196
      %s198 = ssub.s32 %s17, %s24
      %p199 = scmp.eq.s32.totalorder %s198, 0
      %s201 = sadd.s32 %s200, 1
      %s202 = scalar_select %p199, %s200, %s201
      %p205 = pneg %p199
      %p206 = scmp.eq.s32.totalorder %s17, 1
      %p207 = por %p205, %p206
      %p208 = scmp.ne.s32.totalorder %s200, %s203
      %p209 = scmp.eq.s32.totalorder %s17, 0
      %p210 = por %p208, %p209
      %p211 = scmp.ne.s32.totalorder %s200, %s203
      %p212 = scmp.eq.s32.totalorder %s22, 1
      %p213 = por %p211, %p212
      %p214 = scmp.ne.s32.totalorder %s203, %s204
      %p215 = scmp.eq.s32.totalorder %s22, 0
      %p216 = por %p214, %p215
      %p217 = scmp.ne.s32.totalorder %s203, %s204
      %p218 = scmp.eq.s32.totalorder %s23, 1
      %p219 = por %p217, %p218
      %p221 = scmp.ne.s32.totalorder %s204, %s220
      %p222 = scmp.eq.s32.totalorder %s23, 0
      %p223 = por %p221, %p222
      %p224 = scmp.le.s32.totalorder 1, %s17
      %p225 = scmp.lt.s32.totalorder %s17, 3
      %p226 = pnand %p224, %p225
      %p227 = pneg %p226
      // Predicated region
      $region9: #{tpu_custom_call.1} parent=5 // pred_check
        _
      $region10: #{tpu_custom_call.1} parent=5 // pred_check_branch
        %229 = sbr.rel (%p226) target = $region12
      $region11: #{tpu_custom_call.1} parent=5 // pred_region
        %s230 = ssub.s32 %s17, 1
        // Predicated region
        $region13: #{tpu_custom_call.1} parent=11 // pred_check
          %p231 = pneg %p64
        $region14: #{tpu_custom_call.1} parent=11 // pred_check_branch
          %233 = sbr.rel (%p231) target = $region16
        $region15: #{tpu_custom_call.1} parent=11 // pred_region
          _
        $region16: #{tpu_custom_call.1} parent=11 // pred_fallthru
          _
        // Predicated region
        $region17: #{tpu_custom_call.1} parent=11 // pred_check
          %p234 = pneg %p85
        $region18: #{tpu_custom_call.1} parent=11 // pred_check_branch
          %236 = sbr.rel (%p234) target = $region20
        $region19: #{tpu_custom_call.1} parent=11 // pred_region
          _
        $region20: #{tpu_custom_call.1} parent=11 // pred_fallthru
          _
        // Predicated region
        $region21: #{tpu_custom_call.1} parent=11 // pred_check
          %p237 = pneg %p106
        $region22: #{tpu_custom_call.1} parent=11 // pred_check_branch
          %239 = sbr.rel (%p237) target = $region24
        $region23: #{tpu_custom_call.1} parent=11 // pred_region
          _
        $region24: #{tpu_custom_call.1} parent=11 // pred_fallthru
          _
        // Predicated region
        $region25: #{tpu_custom_call.1} parent=11 // pred_check
          %p240 = pneg %p127
        $region26: #{tpu_custom_call.1} parent=11 // pred_check_branch
          %242 = sbr.rel (%p240) target = $region28
        $region27: #{tpu_custom_call.1} parent=11 // pred_region
          _
        $region28: #{tpu_custom_call.1} parent=11 // pred_fallthru
          _
        // Predicated region
        $region29: #{tpu_custom_call.1} parent=11 // pred_check
          %p243 = pneg %p148
        $region30: #{tpu_custom_call.1} parent=11 // pred_check_branch
          %245 = sbr.rel (%p243) target = $region32
        $region31: #{tpu_custom_call.1} parent=11 // pred_region
          _
        $region32: #{tpu_custom_call.1} parent=11 // pred_fallthru
          _
        // Predicated region
        $region33: #{tpu_custom_call.1} parent=11 // pred_check
          %p246 = pneg %p169
        $region34: #{tpu_custom_call.1} parent=11 // pred_check_branch
          %248 = sbr.rel (%p246) target = $region36
        $region35: #{tpu_custom_call.1} parent=11 // pred_region
          _
        $region36: #{tpu_custom_call.1} parent=11 // pred_fallthru
          _
        // Predicated region
        $region37: #{tpu_custom_call.1} parent=11 // pred_check
          %p249 = pneg %p190
        $region38: #{tpu_custom_call.1} parent=11 // pred_check_branch
          %251 = sbr.rel (%p249) target = $region40
        $region39: #{tpu_custom_call.1} parent=11 // pred_region
          _
        $region40: #{tpu_custom_call.1} parent=11 // pred_fallthru
          _
      $region12: #{tpu_custom_call.1} parent=5 // pred_fallthru
        _
      %p252 = scmp.lt.s32.totalorder %s17, 2
      // Predicated region
      $region41: #{tpu_custom_call.1} parent=5 // pred_check
        %p253 = pneg %p252
      $region42: #{tpu_custom_call.1} parent=5 // pred_check_branch
        %255 = sbr.rel (%p253) target = $region44
      $region43: #{tpu_custom_call.1} parent=5 // pred_region
        // Predicated region
        $region45: #{tpu_custom_call.1} parent=43 // pred_check
          %p256 = pneg %p37
        $region46: #{tpu_custom_call.1} parent=43 // pred_check_branch
          %258 = sbr.rel (%p256) target = $region48
        $region47: #{tpu_custom_call.1} parent=43 // pred_region
          %p259 = scmp.lt.s32.totalorder %s17, 1
          %s260 = scalar_select %p259, %s17, 1
          %s261 = smul.addr %s260, 2
          %s262 = smul.addr %s261, 4
          %s263 = scalar_lea.vmem %s0, %s262
        $region48: #{tpu_custom_call.1} parent=43 // pred_fallthru
          _
      $region44: #{tpu_custom_call.1} parent=5 // pred_fallthru
        _
      %p264 = scmp.le.s32.totalorder 1, %s17
      %p265 = scmp.lt.s32.totalorder %s17, 3
      %p266 = pnand %p264, %p265
      %p267 = pneg %p266
      // Predicated region
      $region49: #{tpu_custom_call.1} parent=5 // pred_check
        _
      $region50: #{tpu_custom_call.1} parent=5 // pred_check_branch
        %269 = sbr.rel (%p266) target = $region52
      $region51: #{tpu_custom_call.1} parent=5 // pred_region
        %s270 = ssub.s32 %s17, 1
        %p271 = scmp.lt.s32.totalorder %s22, 1
        %s272 = scalar_select %p271, %s22, 1
        %s273 = smul.addr %s272, 2
        %s274 = smul.addr %s273, 4
        %s275 = scalar_lea.vmem %s0, %s274
        %p276 = pneg %p43
        %p277 = pneg %p40
        %p278 = pneg %p64
        %p279 = pneg %p61
        %p280 = pneg %p85
        %p281 = pneg %p82
        %p282 = pneg %p106
        %p283 = pneg %p103
        %p284 = pneg %p127
        %p285 = pneg %p124
        %p286 = pneg %p148
        %p287 = pneg %p145
        %p288 = pneg %p169
        %p289 = pneg %p166
        %p290 = pneg %p190
        %p291 = pneg %p187
        %p292 = pneg %p216
        %p293 = pneg %p213
        %s294 = sand.u32 %s203, 1
        %s295 = scalar_lea.sflag [#allocation3], %s294
        %s296 = sand.u32 %s203, 1
        %s297 = smul.addr %s296, 16
        %s298 = scalar_lea.vmem [#allocation2], %s297
        %p299 = scmp.lt.s32.totalorder %s22, 1
        %s300 = scalar_select %p299, %s22, 1
        %s301 = smul.addr %s300, 2
        %s302 = smul.addr %s301, 4
        %s303 = scalar_lea.vmem %s0, %s302
        %v304 = vld [vmem:[%s303] sm:$0xff]
        %v305 = vld [vmem:[%s1] sm:$0x3]
        %v306 = vld [vmem:[%s2] sm:$0x3]
        %v308 = vcombine.high %v304, %v304
        %310 = vrot.lane.b32.xlu0 %v304, 17
        %v311 = vpop.permute.xlu0 %310
        %312 = vrot.lane.b32.xlu0 %v308, 17
        %v313 = vpop.permute.xlu0 %312
        %v314 = vlaneseq
        %v315 = vand.u32 %v314, 127
        %vm316 = vcmp.lt.s32.totalorder %v315, 17
        %v317 = vsel %vm316, %v311, %v313
        %v318 = vsel %vm316, %v313, %v311
        %v319 = vadd.s32 %v305, 4294967295
        %vm320 = vcmp.ge.s32.totalorder %v319, 0
        %vm321 = vcmp.lt.s32.totalorder %v319, 16
        %vm322 = vmand %vm320, %vm321
        %v323 = vadd.s32 %v306, 4294967295
        %vm324 = vcmp.ge.s32.totalorder %v323, 0
        %vm325 = vcmp.lt.s32.totalorder %v323, 16
        %vm326 = vmand %vm324, %vm325
        %vm327 = vmand %vm322, %vm326
        %v328 = vsel %vm327, 1, 0
        %v329 = vlaneseq
        %v330 = vshrl.u32 %v329, 7
        %v331 = vsub.s32 0, %v330
        %v332 = vrot.slane %v328, %v331
        %v333 = vlaneseq
        %v334 = vshrl.u32 %v333, 7
        %v335 = vsub.s32 1, %v334
        %v336 = vrot.slane %v328, %v335
        %vm337 = vcmp.eq.s32.totalorder %v332, 1
        %vm338 = vcmp.eq.s32.totalorder %v336, 1
        %v339 = vsel %vm337, %v318, 0.0
        %v340 = vsel %vm338, %v317, 0.0
        %v341 = vld [vmem:[%s3] sm:$0xf]
        %342 = vrot.lane.b32.xlu0 %v304, 16
        %v343 = vpop.permute.xlu0 %342
        %344 = vrot.lane.b32.xlu0 %v308, 16
        %v345 = vpop.permute.xlu0 %344
        %vm346 = vcmp.lt.s32.totalorder %v315, 16
        %v347 = vsel %vm346, %v343, %v345
        %v348 = vsel %vm346, %v345, %v343
        %v349 = vsel %vm322, 1, 0
        %v350 = vlaneseq
        %v351 = vshrl.u32 %v350, 7
        %v352 = vsub.s32 0, %v351
        %v353 = vrot.slane %v349, %v352
        %v354 = vlaneseq
        %v355 = vshrl.u32 %v354, 7
        %v356 = vsub.s32 1, %v355
        %v357 = vrot.slane %v349, %v356
        %vm358 = vcmp.eq.s32.totalorder %v353, 1
        %vm359 = vcmp.eq.s32.totalorder %v357, 1
        %v360 = vsel %vm358, %v348, 0.0
        %v361 = vsel %vm359, %v347, 0.0
        %s362 = scalar_lea.vmem %s3, 4
        %v363 = vld [vmem:[%s362] sm:$0xf]
        %vm364 = vcmask 31744
        %v366 = vsel %vm364, %v363, 0
        %vm368 = vcmask 1043456
        %v370 = vsel %vm368, %v360, 0
        %v373 = vsel %vm368, %v361, 0
        %375 = vmatprep.subr.mxu0 0.0
        %376 = vmatpush1.msra.mxu0 0.0
        %377 = vmatprep.subr.mxu0 0.0
        %378 = vmatpush1.msra.mxu0 0.0
        %379 = vmatprep.subr.mxu0 0.0
        %380 = vmatpush1.msra.mxu0 0.0
        %381 = vmatprep.subr.mxu0 0.0
        %382 = vmatpush1.msra.mxu0 0.0
        %383 = vmatprep.subr.mxu0 0.0
        %384 = vmatpush1.msra.mxu0 0.0
        %385 = vmatprep.subr.mxu0 0.0
        %386 = vmatpush1.msra.mxu0 0.0
        %387 = vmatprep.subr.mxu0 0.0
        %388 = vmatpush1.msra.mxu0 0.0
        %389 = vmatprep.subr.mxu0 0.0
        %390 = vmatpush1.msra.mxu0 0.0
        %391 = vmatprep.subr.mxu0 0.0
        %392 = vmatpush1.msra.mxu0 0.0
        %393 = vmatprep.subr.mxu0 0.0
        %394 = vmatpush1.msra.mxu0 0.0
        %395 = vmatprep.subr.mxu0 0.0
        %396 = vmatpush1.msra.mxu0 0.0
        %397 = vmatprep.subr.mxu0 0.0
        %398 = vmatpush1.msra.mxu0 0.0
        %399 = vmatprep.subr.mxu0 0.0
        %400 = vmatpush1.msra.mxu0 0.0
        %401 = vmatprep.subr.mxu0 0.0
        %402 = vmatpush1.msra.mxu0 0.0
        %403 = vmatprep.subr.mxu0 0.0
        %404 = vmatpush1.msra.mxu0 0.0
        %405 = vmatprep.subr.mxu0 %v373
        %406 = vmatpush1.msra.mxu0 %v370
        %407 = vmatprep.subr.mxu0 0.0
        %408 = vmatpush2.msra.mxu0 0.0
        %409 = vmatprep.subr.mxu0 0.0
        %410 = vmatpush2.msra.mxu0 0.0
        %411 = vmatprep.subr.mxu0 0.0
        %412 = vmatpush2.msra.mxu0 0.0
        %413 = vmatprep.subr.mxu0 0.0
        %414 = vmatpush2.msra.mxu0 0.0
        %415 = vmatprep.subr.mxu0 0.0
        %416 = vmatpush2.msra.mxu0 0.0
        %417 = vmatprep.subr.mxu0 0.0
        %418 = vmatpush2.msra.mxu0 0.0
        %419 = vmatprep.subr.mxu0 0.0
        %420 = vmatpush2.msra.mxu0 0.0
        %421 = vmatprep.subr.mxu0 0.0
        %422 = vmatpush2.msra.mxu0 0.0
        %423 = vmatprep.subr.mxu0 0.0
        %424 = vmatpush2.msra.mxu0 0.0
        %425 = vmatprep.subr.mxu0 0.0
        %426 = vmatpush2.msra.mxu0 0.0
        %427 = vmatprep.subr.mxu0 0.0
        %428 = vmatpush2.msra.mxu0 0.0
        %429 = vmatprep.subr.mxu0 0.0
        %430 = vmatpush2.msra.mxu0 0.0
        %431 = vmatprep.subr.mxu0 0.0
        %432 = vmatpush2.msra.mxu0 0.0
        %433 = vmatprep.subr.mxu0 0.0
        %434 = vmatpush2.msra.mxu0 0.0
        %435 = vmatprep.subr.mxu0 0.0
        %436 = vmatpush2.msra.mxu0 0.0
        %437 = vmatprep.subr.mxu0 0.0
        %438 = vmatpush2.msra.mxu0 0.0
        %439 = vmatprep.mubr.f32.mxu0 0.0
        %440 = vmatmul.mubr.f32.gmra.mxu0 %v366
        %v441 = vpop.f32.mrf.mxu0
        %v442 = vadd.f32 0.0, %v441
        %v443 = vpop.f32.mrf.mxu0
        %v444 = vadd.f32 0.0, %v443
        %445 = vdwg.mxu0
        %v447 = vsel %vm364, %v341, 0
        %v450 = vsel %vm368, %v339, 0
        %v453 = vsel %vm368, %v340, 0
        %455 = vmatprep.subr.mxu0 0.0
        %456 = vmatpush1.msra.mxu0 0.0
        %457 = vmatprep.subr.mxu0 0.0
        %458 = vmatpush1.msra.mxu0 0.0
        %459 = vmatprep.subr.mxu0 0.0
        %460 = vmatpush1.msra.mxu0 0.0
        %461 = vmatprep.subr.mxu0 0.0
        %462 = vmatpush1.msra.mxu0 0.0
        %463 = vmatprep.subr.mxu0 0.0
        %464 = vmatpush1.msra.mxu0 0.0
        %465 = vmatprep.subr.mxu0 0.0
        %466 = vmatpush1.msra.mxu0 0.0
        %467 = vmatprep.subr.mxu0 0.0
        %468 = vmatpush1.msra.mxu0 0.0
        %469 = vmatprep.subr.mxu0 0.0
        %470 = vmatpush1.msra.mxu0 0.0
        %471 = vmatprep.subr.mxu0 0.0
        %472 = vmatpush1.msra.mxu0 0.0
        %473 = vmatprep.subr.mxu0 0.0
        %474 = vmatpush1.msra.mxu0 0.0
        %475 = vmatprep.subr.mxu0 0.0
        %476 = vmatpush1.msra.mxu0 0.0
        %477 = vmatprep.subr.mxu0 0.0
        %478 = vmatpush1.msra.mxu0 0.0
        %479 = vmatprep.subr.mxu0 0.0
        %480 = vmatpush1.msra.mxu0 0.0
        %481 = vmatprep.subr.mxu0 0.0
        %482 = vmatpush1.msra.mxu0 0.0
        %483 = vmatprep.subr.mxu0 0.0
        %484 = vmatpush1.msra.mxu0 0.0
        %485 = vmatprep.subr.mxu0 %v453
        %486 = vmatpush1.msra.mxu0 %v450
        %487 = vmatprep.subr.mxu0 0.0
        %488 = vmatpush2.msra.mxu0 0.0
        %489 = vmatprep.subr.mxu0 0.0
        %490 = vmatpush2.msra.mxu0 0.0
        %491 = vmatprep.subr.mxu0 0.0
        %492 = vmatpush2.msra.mxu0 0.0
        %493 = vmatprep.subr.mxu0 0.0
        %494 = vmatpush2.msra.mxu0 0.0
        %495 = vmatprep.subr.mxu0 0.0
        %496 = vmatpush2.msra.mxu0 0.0
        %497 = vmatprep.subr.mxu0 0.0
        %498 = vmatpush2.msra.mxu0 0.0
        %499 = vmatprep.subr.mxu0 0.0
        %500 = vmatpush2.msra.mxu0 0.0
        %501 = vmatprep.subr.mxu0 0.0
        %502 = vmatpush2.msra.mxu0 0.0
        %503 = vmatprep.subr.mxu0 0.0
        %504 = vmatpush2.msra.mxu0 0.0
        %505 = vmatprep.subr.mxu0 0.0
        %506 = vmatpush2.msra.mxu0 0.0
        %507 = vmatprep.subr.mxu0 0.0
        %508 = vmatpush2.msra.mxu0 0.0
        %509 = vmatprep.subr.mxu0 0.0
        %510 = vmatpush2.msra.mxu0 0.0
        %511 = vmatprep.subr.mxu0 0.0
        %512 = vmatpush2.msra.mxu0 0.0
        %513 = vmatprep.subr.mxu0 0.0
        %514 = vmatpush2.msra.mxu0 0.0
        %515 = vmatprep.subr.mxu0 0.0
        %516 = vmatpush2.msra.mxu0 0.0
        %517 = vmatprep.subr.mxu0 0.0
        %518 = vmatpush2.msra.mxu0 0.0
        %519 = vmatprep.mubr.f32.mxu0 0.0
        %520 = vmatmul.mubr.f32.gmra.mxu0 %v447
        %v521 = vpop.f32.mrf.mxu0
        %v522 = vadd.f32 %v442, %v521
        %v523 = vpop.f32.mrf.mxu0
        %v524 = vadd.f32 %v444, %v523
        %525 = vdwg.mxu0
        %526 = vrot.lane.b32.xlu0 %v304, 15
        %v527 = vpop.permute.xlu0 %526
        %528 = vrot.lane.b32.xlu0 %v308, 15
        %v529 = vpop.permute.xlu0 %528
        %vm530 = vcmp.lt.s32.totalorder %v315, 15
        %v531 = vsel %vm530, %v527, %v529
        %v532 = vsel %vm530, %v529, %v527
        %v533 = vadd.s32 %v306, 1
        %vm534 = vcmp.ge.s32.totalorder %v533, 0
        %vm535 = vcmp.lt.s32.totalorder %v533, 16
        %vm536 = vmand %vm534, %vm535
        %vm537 = vmand %vm322, %vm536
        %v538 = vsel %vm537, 1, 0
        %v539 = vlaneseq
        %v540 = vshrl.u32 %v539, 7
        %v541 = vsub.s32 0, %v540
        %v542 = vrot.slane %v538, %v541
        %v543 = vlaneseq
        %v544 = vshrl.u32 %v543, 7
        %v545 = vsub.s32 1, %v544
        %v546 = vrot.slane %v538, %v545
        %vm547 = vcmp.eq.s32.totalorder %v542, 1
        %vm548 = vcmp.eq.s32.totalorder %v546, 1
        %v549 = vsel %vm547, %v532, 0.0
        %v550 = vsel %vm548, %v531, 0.0
        %s551 = scalar_lea.vmem %s3, 8
        %v552 = vld [vmem:[%s551] sm:$0xf]
        %v554 = vsel %vm364, %v552, 0
        %v557 = vsel %vm368, %v549, 0
        %v560 = vsel %vm368, %v550, 0
        %562 = vmatprep.subr.mxu0 0.0
        %563 = vmatpush1.msra.mxu0 0.0
        %564 = vmatprep.subr.mxu0 0.0
        %565 = vmatpush1.msra.mxu0 0.0
        %566 = vmatprep.subr.mxu0 0.0
        %567 = vmatpush1.msra.mxu0 0.0
        %568 = vmatprep.subr.mxu0 0.0
        %569 = vmatpush1.msra.mxu0 0.0
        %570 = vmatprep.subr.mxu0 0.0
        %571 = vmatpush1.msra.mxu0 0.0
        %572 = vmatprep.subr.mxu0 0.0
        %573 = vmatpush1.msra.mxu0 0.0
        %574 = vmatprep.subr.mxu0 0.0
        %575 = vmatpush1.msra.mxu0 0.0
        %576 = vmatprep.subr.mxu0 0.0
        %577 = vmatpush1.msra.mxu0 0.0
        %578 = vmatprep.subr.mxu0 0.0
        %579 = vmatpush1.msra.mxu0 0.0
        %580 = vmatprep.subr.mxu0 0.0
        %581 = vmatpush1.msra.mxu0 0.0
        %582 = vmatprep.subr.mxu0 0.0
        %583 = vmatpush1.msra.mxu0 0.0
        %584 = vmatprep.subr.mxu0 0.0
        %585 = vmatpush1.msra.mxu0 0.0
        %586 = vmatprep.subr.mxu0 0.0
        %587 = vmatpush1.msra.mxu0 0.0
        %588 = vmatprep.subr.mxu0 0.0
        %589 = vmatpush1.msra.mxu0 0.0
        %590 = vmatprep.subr.mxu0 0.0
        %591 = vmatpush1.msra.mxu0 0.0
        %592 = vmatprep.subr.mxu0 %v560
        %593 = vmatpush1.msra.mxu0 %v557
        %594 = vmatprep.subr.mxu0 0.0
        %595 = vmatpush2.msra.mxu0 0.0
        %596 = vmatprep.subr.mxu0 0.0
        %597 = vmatpush2.msra.mxu0 0.0
        %598 = vmatprep.subr.mxu0 0.0
        %599 = vmatpush2.msra.mxu0 0.0
        %600 = vmatprep.subr.mxu0 0.0
        %601 = vmatpush2.msra.mxu0 0.0
        %602 = vmatprep.subr.mxu0 0.0
        %603 = vmatpush2.msra.mxu0 0.0
        %604 = vmatprep.subr.mxu0 0.0
        %605 = vmatpush2.msra.mxu0 0.0
        %606 = vmatprep.subr.mxu0 0.0
        %607 = vmatpush2.msra.mxu0 0.0
        %608 = vmatprep.subr.mxu0 0.0
        %609 = vmatpush2.msra.mxu0 0.0
        %610 = vmatprep.subr.mxu0 0.0
        %611 = vmatpush2.msra.mxu0 0.0
        %612 = vmatprep.subr.mxu0 0.0
        %613 = vmatpush2.msra.mxu0 0.0
        %614 = vmatprep.subr.mxu0 0.0
        %615 = vmatpush2.msra.mxu0 0.0
        %616 = vmatprep.subr.mxu0 0.0
        %617 = vmatpush2.msra.mxu0 0.0
        %618 = vmatprep.subr.mxu0 0.0
        %619 = vmatpush2.msra.mxu0 0.0
        %620 = vmatprep.subr.mxu0 0.0
        %621 = vmatpush2.msra.mxu0 0.0
        %622 = vmatprep.subr.mxu0 0.0
        %623 = vmatpush2.msra.mxu0 0.0
        %624 = vmatprep.subr.mxu0 0.0
        %625 = vmatpush2.msra.mxu0 0.0
        %626 = vmatprep.mubr.f32.mxu0 0.0
        %627 = vmatmul.mubr.f32.gmra.mxu0 %v554
        %v628 = vpop.f32.mrf.mxu0
        %v629 = vadd.f32 0.0, %v628
        %v630 = vpop.f32.mrf.mxu0
        %v631 = vadd.f32 0.0, %v630
        %632 = vdwg.mxu0
        %v633 = vadd.f32 %v522, %v629
        %v634 = vadd.f32 %v524, %v631
        %635 = vrot.lane.b32.xlu0 %v304, 1
        %v636 = vpop.permute.xlu0 %635
        %637 = vrot.lane.b32.xlu0 %v308, 1
        %v638 = vpop.permute.xlu0 %637
        %vm639 = vcmp.lt.s32.totalorder %v315, 1
        %v640 = vsel %vm639, %v636, %v638
        %v641 = vsel %vm639, %v638, %v636
        %v642 = vsel %vm326, 1, 0
        %v643 = vlaneseq
        %v644 = vshrl.u32 %v643, 7
        %v645 = vsub.s32 0, %v644
        %v646 = vrot.slane %v642, %v645
        %v647 = vlaneseq
        %v648 = vshrl.u32 %v647, 7
        %v649 = vsub.s32 1, %v648
        %v650 = vrot.slane %v642, %v649
        %vm651 = vcmp.eq.s32.totalorder %v646, 1
        %vm652 = vcmp.eq.s32.totalorder %v650, 1
        %v653 = vsel %vm651, %v641, 0.0
        %v654 = vsel %vm652, %v640, 0.0
        %s655 = scalar_lea.vmem %s3, 12
        %v656 = vld [vmem:[%s655] sm:$0xf]
        %v658 = vsel %vm364, %v656, 0
        %v661 = vsel %vm368, %v653, 0
        %v664 = vsel %vm368, %v654, 0
        %666 = vmatprep.subr.mxu0 0.0
        %667 = vmatpush1.msra.mxu0 0.0
        %668 = vmatprep.subr.mxu0 0.0
        %669 = vmatpush1.msra.mxu0 0.0
        %670 = vmatprep.subr.mxu0 0.0
        %671 = vmatpush1.msra.mxu0 0.0
        %672 = vmatprep.subr.mxu0 0.0
        %673 = vmatpush1.msra.mxu0 0.0
        %674 = vmatprep.subr.mxu0 0.0
        %675 = vmatpush1.msra.mxu0 0.0
        %676 = vmatprep.subr.mxu0 0.0
        %677 = vmatpush1.msra.mxu0 0.0
        %678 = vmatprep.subr.mxu0 0.0
        %679 = vmatpush1.msra.mxu0 0.0
        %680 = vmatprep.subr.mxu0 0.0
        %681 = vmatpush1.msra.mxu0 0.0
        %682 = vmatprep.subr.mxu0 0.0
        %683 = vmatpush1.msra.mxu0 0.0
        %684 = vmatprep.subr.mxu0 0.0
        %685 = vmatpush1.msra.mxu0 0.0
        %686 = vmatprep.subr.mxu0 0.0
        %687 = vmatpush1.msra.mxu0 0.0
        %688 = vmatprep.subr.mxu0 0.0
        %689 = vmatpush1.msra.mxu0 0.0
        %690 = vmatprep.subr.mxu0 0.0
        %691 = vmatpush1.msra.mxu0 0.0
        %692 = vmatprep.subr.mxu0 0.0
        %693 = vmatpush1.msra.mxu0 0.0
        %694 = vmatprep.subr.mxu0 0.0
        %695 = vmatpush1.msra.mxu0 0.0
        %696 = vmatprep.subr.mxu0 %v664
        %697 = vmatpush1.msra.mxu0 %v661
        %698 = vmatprep.subr.mxu0 0.0
        %699 = vmatpush2.msra.mxu0 0.0
        %700 = vmatprep.subr.mxu0 0.0
        %701 = vmatpush2.msra.mxu0 0.0
        %702 = vmatprep.subr.mxu0 0.0
        %703 = vmatpush2.msra.mxu0 0.0
        %704 = vmatprep.subr.mxu0 0.0
        %705 = vmatpush2.msra.mxu0 0.0
        %706 = vmatprep.subr.mxu0 0.0
        %707 = vmatpush2.msra.mxu0 0.0
        %708 = vmatprep.subr.mxu0 0.0
        %709 = vmatpush2.msra.mxu0 0.0
        %710 = vmatprep.subr.mxu0 0.0
        %711 = vmatpush2.msra.mxu0 0.0
        %712 = vmatprep.subr.mxu0 0.0
        %713 = vmatpush2.msra.mxu0 0.0
        %714 = vmatprep.subr.mxu0 0.0
        %715 = vmatpush2.msra.mxu0 0.0
        %716 = vmatprep.subr.mxu0 0.0
        %717 = vmatpush2.msra.mxu0 0.0
        %718 = vmatprep.subr.mxu0 0.0
        %719 = vmatpush2.msra.mxu0 0.0
        %720 = vmatprep.subr.mxu0 0.0
        %721 = vmatpush2.msra.mxu0 0.0
        %722 = vmatprep.subr.mxu0 0.0
        %723 = vmatpush2.msra.mxu0 0.0
        %724 = vmatprep.subr.mxu0 0.0
        %725 = vmatpush2.msra.mxu0 0.0
        %726 = vmatprep.subr.mxu0 0.0
        %727 = vmatpush2.msra.mxu0 0.0
        %728 = vmatprep.subr.mxu0 0.0
        %729 = vmatpush2.msra.mxu0 0.0
        %730 = vmatprep.mubr.f32.mxu0 0.0
        %731 = vmatmul.mubr.f32.gmra.mxu0 %v658
        %v732 = vpop.f32.mrf.mxu0
        %v733 = vadd.f32 0.0, %v732
        %v734 = vpop.f32.mrf.mxu0
        %v735 = vadd.f32 0.0, %v734
        %736 = vdwg.mxu0
        %v737 = vadd.f32 %v633, %v733
        %v738 = vadd.f32 %v634, %v735
        %s739 = scalar_lea.vmem %s3, 16
        %v740 = vld [vmem:[%s739] sm:$0xf]
        %v742 = vsel %vm364, %v740, 0
        %v744 = vsel %vm368, %v304, 0
        %v746 = vsel %vm368, %v308, 0
        %748 = vmatprep.subr.mxu0 0.0
        %749 = vmatpush1.msra.mxu0 0.0
        %750 = vmatprep.subr.mxu0 0.0
        %751 = vmatpush1.msra.mxu0 0.0
        %752 = vmatprep.subr.mxu0 0.0
        %753 = vmatpush1.msra.mxu0 0.0
        %754 = vmatprep.subr.mxu0 0.0
        %755 = vmatpush1.msra.mxu0 0.0
        %756 = vmatprep.subr.mxu0 0.0
        %757 = vmatpush1.msra.mxu0 0.0
        %758 = vmatprep.subr.mxu0 0.0
        %759 = vmatpush1.msra.mxu0 0.0
        %760 = vmatprep.subr.mxu0 0.0
        %761 = vmatpush1.msra.mxu0 0.0
        %762 = vmatprep.subr.mxu0 0.0
        %763 = vmatpush1.msra.mxu0 0.0
        %764 = vmatprep.subr.mxu0 0.0
        %765 = vmatpush1.msra.mxu0 0.0
        %766 = vmatprep.subr.mxu0 0.0
        %767 = vmatpush1.msra.mxu0 0.0
        %768 = vmatprep.subr.mxu0 0.0
        %769 = vmatpush1.msra.mxu0 0.0
        %770 = vmatprep.subr.mxu0 0.0
        %771 = vmatpush1.msra.mxu0 0.0
        %772 = vmatprep.subr.mxu0 0.0
        %773 = vmatpush1.msra.mxu0 0.0
        %774 = vmatprep.subr.mxu0 0.0
        %775 = vmatpush1.msra.mxu0 0.0
        %776 = vmatprep.subr.mxu0 0.0
        %777 = vmatpush1.msra.mxu0 0.0
        %778 = vmatprep.subr.mxu0 %v746
        %779 = vmatpush1.msra.mxu0 %v744
        %780 = vmatprep.subr.mxu0 0.0
        %781 = vmatpush2.msra.mxu0 0.0
        %782 = vmatprep.subr.mxu0 0.0
        %783 = vmatpush2.msra.mxu0 0.0
        %784 = vmatprep.subr.mxu0 0.0
        %785 = vmatpush2.msra.mxu0 0.0
        %786 = vmatprep.subr.mxu0 0.0
        %787 = vmatpush2.msra.mxu0 0.0
        %788 = vmatprep.subr.mxu0 0.0
        %789 = vmatpush2.msra.mxu0 0.0
        %790 = vmatprep.subr.mxu0 0.0
        %791 = vmatpush2.msra.mxu0 0.0
        %792 = vmatprep.subr.mxu0 0.0
        %793 = vmatpush2.msra.mxu0 0.0
        %794 = vmatprep.subr.mxu0 0.0
        %795 = vmatpush2.msra.mxu0 0.0
        %796 = vmatprep.subr.mxu0 0.0
        %797 = vmatpush2.msra.mxu0 0.0
        %798 = vmatprep.subr.mxu0 0.0
        %799 = vmatpush2.msra.mxu0 0.0
        %800 = vmatprep.subr.mxu0 0.0
        %801 = vmatpush2.msra.mxu0 0.0
        %802 = vmatprep.subr.mxu0 0.0
        %803 = vmatpush2.msra.mxu0 0.0
        %804 = vmatprep.subr.mxu0 0.0
        %805 = vmatpush2.msra.mxu0 0.0
        %806 = vmatprep.subr.mxu0 0.0
        %807 = vmatpush2.msra.mxu0 0.0
        %808 = vmatprep.subr.mxu0 0.0
        %809 = vmatpush2.msra.mxu0 0.0
        %810 = vmatprep.subr.mxu0 0.0
        %811 = vmatpush2.msra.mxu0 0.0
        %812 = vmatprep.mubr.f32.mxu0 0.0
        %813 = vmatmul.mubr.f32.gmra.mxu0 %v742
        %v814 = vpop.f32.mrf.mxu0
        %v815 = vadd.f32 0.0, %v814
        %v816 = vpop.f32.mrf.mxu0
        %v817 = vadd.f32 0.0, %v816
        %818 = vdwg.mxu0
        %v819 = vadd.f32 %v737, %v815
        %v820 = vadd.f32 %v738, %v817
        %821 = vrot.lane.b32.xlu0 %v304, 127
        %v822 = vpop.permute.xlu0 %821
        %823 = vrot.lane.b32.xlu0 %v308, 127
        %v824 = vpop.permute.xlu0 %823
        %vm825 = vcmp.lt.s32.totalorder %v315, 127
        %v826 = vsel %vm825, %v822, %v824
        %v827 = vsel %vm825, %v824, %v822
        %v828 = vsel %vm536, 1, 0
        %v829 = vlaneseq
        %v830 = vshrl.u32 %v829, 7
        %v831 = vsub.s32 0, %v830
        %v832 = vrot.slane %v828, %v831
        %v833 = vlaneseq
        %v834 = vshrl.u32 %v833, 7
        %v835 = vsub.s32 1, %v834
        %v836 = vrot.slane %v828, %v835
        %vm837 = vcmp.eq.s32.totalorder %v832, 1
        %vm838 = vcmp.eq.s32.totalorder %v836, 1
        %v839 = vsel %vm837, %v826, 0.0
        %v840 = vsel %vm838, %v827, 0.0
        %s841 = scalar_lea.vmem %s3, 20
        %v842 = vld [vmem:[%s841] sm:$0xf]
        %v844 = vsel %vm364, %v842, 0
        %v847 = vsel %vm368, %v839, 0
        %v850 = vsel %vm368, %v840, 0
        %852 = vmatprep.subr.mxu0 0.0
        %853 = vmatpush1.msra.mxu0 0.0
        %854 = vmatprep.subr.mxu0 0.0
        %855 = vmatpush1.msra.mxu0 0.0
        %856 = vmatprep.subr.mxu0 0.0
        %857 = vmatpush1.msra.mxu0 0.0
        %858 = vmatprep.subr.mxu0 0.0
        %859 = vmatpush1.msra.mxu0 0.0
        %860 = vmatprep.subr.mxu0 0.0
        %861 = vmatpush1.msra.mxu0 0.0
        %862 = vmatprep.subr.mxu0 0.0
        %863 = vmatpush1.msra.mxu0 0.0
        %864 = vmatprep.subr.mxu0 0.0
        %865 = vmatpush1.msra.mxu0 0.0
        %866 = vmatprep.subr.mxu0 0.0
        %867 = vmatpush1.msra.mxu0 0.0
        %868 = vmatprep.subr.mxu0 0.0
        %869 = vmatpush1.msra.mxu0 0.0
        %870 = vmatprep.subr.mxu0 0.0
        %871 = vmatpush1.msra.mxu0 0.0
        %872 = vmatprep.subr.mxu0 0.0
        %873 = vmatpush1.msra.mxu0 0.0
        %874 = vmatprep.subr.mxu0 0.0
        %875 = vmatpush1.msra.mxu0 0.0
        %876 = vmatprep.subr.mxu0 0.0
        %877 = vmatpush1.msra.mxu0 0.0
        %878 = vmatprep.subr.mxu0 0.0
        %879 = vmatpush1.msra.mxu0 0.0
        %880 = vmatprep.subr.mxu0 0.0
        %881 = vmatpush1.msra.mxu0 0.0
        %882 = vmatprep.subr.mxu0 %v850
        %883 = vmatpush1.msra.mxu0 %v847
        %884 = vmatprep.subr.mxu0 0.0
        %885 = vmatpush2.msra.mxu0 0.0
        %886 = vmatprep.subr.mxu0 0.0
        %887 = vmatpush2.msra.mxu0 0.0
        %888 = vmatprep.subr.mxu0 0.0
        %889 = vmatpush2.msra.mxu0 0.0
        %890 = vmatprep.subr.mxu0 0.0
        %891 = vmatpush2.msra.mxu0 0.0
        %892 = vmatprep.subr.mxu0 0.0
        %893 = vmatpush2.msra.mxu0 0.0
        %894 = vmatprep.subr.mxu0 0.0
        %895 = vmatpush2.msra.mxu0 0.0
        %896 = vmatprep.subr.mxu0 0.0
        %897 = vmatpush2.msra.mxu0 0.0
        %898 = vmatprep.subr.mxu0 0.0
        %899 = vmatpush2.msra.mxu0 0.0
        %900 = vmatprep.subr.mxu0 0.0
        %901 = vmatpush2.msra.mxu0 0.0
        %902 = vmatprep.subr.mxu0 0.0
        %903 = vmatpush2.msra.mxu0 0.0
        %904 = vmatprep.subr.mxu0 0.0
        %905 = vmatpush2.msra.mxu0 0.0
        %906 = vmatprep.subr.mxu0 0.0
        %907 = vmatpush2.msra.mxu0 0.0
        %908 = vmatprep.subr.mxu0 0.0
        %909 = vmatpush2.msra.mxu0 0.0
        %910 = vmatprep.subr.mxu0 0.0
        %911 = vmatpush2.msra.mxu0 0.0
        %912 = vmatprep.subr.mxu0 0.0
        %913 = vmatpush2.msra.mxu0 0.0
        %914 = vmatprep.subr.mxu0 0.0
        %915 = vmatpush2.msra.mxu0 0.0
        %916 = vmatprep.mubr.f32.mxu0 0.0
        %917 = vmatmul.mubr.f32.gmra.mxu0 %v844
        %v918 = vpop.f32.mrf.mxu0
        %v919 = vadd.f32 0.0, %v918
        %v920 = vpop.f32.mrf.mxu0
        %v921 = vadd.f32 0.0, %v920
        %922 = vdwg.mxu0
        %v923 = vadd.f32 %v819, %v919
        %v924 = vadd.f32 %v820, %v921
        %925 = vrot.lane.b32.xlu0 %v304, 113
        %v926 = vpop.permute.xlu0 %925
        %927 = vrot.lane.b32.xlu0 %v308, 113
        %v928 = vpop.permute.xlu0 %927
        %vm929 = vcmp.lt.s32.totalorder %v315, 113
        %v930 = vsel %vm929, %v926, %v928
        %v931 = vsel %vm929, %v928, %v926
        %v932 = vadd.s32 %v305, 1
        %vm933 = vcmp.ge.s32.totalorder %v932, 0
        %vm934 = vcmp.lt.s32.totalorder %v932, 16
        %vm935 = vmand %vm933, %vm934
        %vm936 = vmand %vm935, %vm326
        %v937 = vsel %vm936, 1, 0
        %v938 = vlaneseq
        %v939 = vshrl.u32 %v938, 7
        %v940 = vsub.s32 0, %v939
        %v941 = vrot.slane %v937, %v940
        %v942 = vlaneseq
        %v943 = vshrl.u32 %v942, 7
        %v944 = vsub.s32 1, %v943
        %v945 = vrot.slane %v937, %v944
        %vm946 = vcmp.eq.s32.totalorder %v941, 1
        %vm947 = vcmp.eq.s32.totalorder %v945, 1
        %v948 = vsel %vm946, %v930, 0.0
        %v949 = vsel %vm947, %v931, 0.0
        %s950 = scalar_lea.vmem %s3, 24
        %v951 = vld [vmem:[%s950] sm:$0xf]
        %v953 = vsel %vm364, %v951, 0
        %v956 = vsel %vm368, %v948, 0
        %v959 = vsel %vm368, %v949, 0
        %961 = vmatprep.subr.mxu0 0.0
        %962 = vmatpush1.msra.mxu0 0.0
        %963 = vmatprep.subr.mxu0 0.0
        %964 = vmatpush1.msra.mxu0 0.0
        %965 = vmatprep.subr.mxu0 0.0
        %966 = vmatpush1.msra.mxu0 0.0
        %967 = vmatprep.subr.mxu0 0.0
        %968 = vmatpush1.msra.mxu0 0.0
        %969 = vmatprep.subr.mxu0 0.0
        %970 = vmatpush1.msra.mxu0 0.0
        %971 = vmatprep.subr.mxu0 0.0
        %972 = vmatpush1.msra.mxu0 0.0
        %973 = vmatprep.subr.mxu0 0.0
        %974 = vmatpush1.msra.mxu0 0.0
        %975 = vmatprep.subr.mxu0 0.0
        %976 = vmatpush1.msra.mxu0 0.0
        %977 = vmatprep.subr.mxu0 0.0
        %978 = vmatpush1.msra.mxu0 0.0
        %979 = vmatprep.subr.mxu0 0.0
        %980 = vmatpush1.msra.mxu0 0.0
        %981 = vmatprep.subr.mxu0 0.0
        %982 = vmatpush1.msra.mxu0 0.0
        %983 = vmatprep.subr.mxu0 0.0
        %984 = vmatpush1.msra.mxu0 0.0
        %985 = vmatprep.subr.mxu0 0.0
        %986 = vmatpush1.msra.mxu0 0.0
        %987 = vmatprep.subr.mxu0 0.0
        %988 = vmatpush1.msra.mxu0 0.0
        %989 = vmatprep.subr.mxu0 0.0
        %990 = vmatpush1.msra.mxu0 0.0
        %991 = vmatprep.subr.mxu0 %v959
        %992 = vmatpush1.msra.mxu0 %v956
        %993 = vmatprep.subr.mxu0 0.0
        %994 = vmatpush2.msra.mxu0 0.0
        %995 = vmatprep.subr.mxu0 0.0
        %996 = vmatpush2.msra.mxu0 0.0
        %997 = vmatprep.subr.mxu0 0.0
        %998 = vmatpush2.msra.mxu0 0.0
        %999 = vmatprep.subr.mxu0 0.0
        %1000 = vmatpush2.msra.mxu0 0.0
        %1001 = vmatprep.subr.mxu0 0.0
        %1002 = vmatpush2.msra.mxu0 0.0
        %1003 = vmatprep.subr.mxu0 0.0
        %1004 = vmatpush2.msra.mxu0 0.0
        %1005 = vmatprep.subr.mxu0 0.0
        %1006 = vmatpush2.msra.mxu0 0.0
        %1007 = vmatprep.subr.mxu0 0.0
        %1008 = vmatpush2.msra.mxu0 0.0
        %1009 = vmatprep.subr.mxu0 0.0
        %1010 = vmatpush2.msra.mxu0 0.0
        %1011 = vmatprep.subr.mxu0 0.0
        %1012 = vmatpush2.msra.mxu0 0.0
        %1013 = vmatprep.subr.mxu0 0.0
        %1014 = vmatpush2.msra.mxu0 0.0
        %1015 = vmatprep.subr.mxu0 0.0
        %1016 = vmatpush2.msra.mxu0 0.0
        %1017 = vmatprep.subr.mxu0 0.0
        %1018 = vmatpush2.msra.mxu0 0.0
        %1019 = vmatprep.subr.mxu0 0.0
        %1020 = vmatpush2.msra.mxu0 0.0
        %1021 = vmatprep.subr.mxu0 0.0
        %1022 = vmatpush2.msra.mxu0 0.0
        %1023 = vmatprep.subr.mxu0 0.0
        %1024 = vmatpush2.msra.mxu0 0.0
        %1025 = vmatprep.mubr.f32.mxu0 0.0
        %1026 = vmatmul.mubr.f32.gmra.mxu0 %v953
        %v1027 = vpop.f32.mrf.mxu0
        %v1028 = vadd.f32 0.0, %v1027
        %v1029 = vpop.f32.mrf.mxu0
        %v1030 = vadd.f32 0.0, %v1029
        %1031 = vdwg.mxu0
        %v1032 = vadd.f32 %v923, %v1028
        %v1033 = vadd.f32 %v924, %v1030
        %1034 = vrot.lane.b32.xlu0 %v304, 112
        %v1035 = vpop.permute.xlu0 %1034
        %1036 = vrot.lane.b32.xlu0 %v308, 112
        %v1037 = vpop.permute.xlu0 %1036
        %vm1038 = vcmp.lt.s32.totalorder %v315, 112
        %v1039 = vsel %vm1038, %v1035, %v1037
        %v1040 = vsel %vm1038, %v1037, %v1035
        %v1041 = vsel %vm935, 1, 0
        %v1042 = vlaneseq
        %v1043 = vshrl.u32 %v1042, 7
        %v1044 = vsub.s32 0, %v1043
        %v1045 = vrot.slane %v1041, %v1044
        %v1046 = vlaneseq
        %v1047 = vshrl.u32 %v1046, 7
        %v1048 = vsub.s32 1, %v1047
        %v1049 = vrot.slane %v1041, %v1048
        %vm1050 = vcmp.eq.s32.totalorder %v1045, 1
        %vm1051 = vcmp.eq.s32.totalorder %v1049, 1
        %v1052 = vsel %vm1050, %v1039, 0.0
        %v1053 = vsel %vm1051, %v1040, 0.0
        %s1054 = scalar_lea.vmem %s3, 28
        %v1055 = vld [vmem:[%s1054] sm:$0xf]
        %v1057 = vsel %vm364, %v1055, 0
        %v1060 = vsel %vm368, %v1052, 0
        %v1063 = vsel %vm368, %v1053, 0
        %1065 = vmatprep.subr.mxu0 0.0
        %1066 = vmatpush1.msra.mxu0 0.0
        %1067 = vmatprep.subr.mxu0 0.0
        %1068 = vmatpush1.msra.mxu0 0.0
        %1069 = vmatprep.subr.mxu0 0.0
        %1070 = vmatpush1.msra.mxu0 0.0
        %1071 = vmatprep.subr.mxu0 0.0
        %1072 = vmatpush1.msra.mxu0 0.0
        %1073 = vmatprep.subr.mxu0 0.0
        %1074 = vmatpush1.msra.mxu0 0.0
        %1075 = vmatprep.subr.mxu0 0.0
        %1076 = vmatpush1.msra.mxu0 0.0
        %1077 = vmatprep.subr.mxu0 0.0
        %1078 = vmatpush1.msra.mxu0 0.0
        %1079 = vmatprep.subr.mxu0 0.0
        %1080 = vmatpush1.msra.mxu0 0.0
        %1081 = vmatprep.subr.mxu0 0.0
        %1082 = vmatpush1.msra.mxu0 0.0
        %1083 = vmatprep.subr.mxu0 0.0
        %1084 = vmatpush1.msra.mxu0 0.0
        %1085 = vmatprep.subr.mxu0 0.0
        %1086 = vmatpush1.msra.mxu0 0.0
        %1087 = vmatprep.subr.mxu0 0.0
        %1088 = vmatpush1.msra.mxu0 0.0
        %1089 = vmatprep.subr.mxu0 0.0
        %1090 = vmatpush1.msra.mxu0 0.0
        %1091 = vmatprep.subr.mxu0 0.0
        %1092 = vmatpush1.msra.mxu0 0.0
        %1093 = vmatprep.subr.mxu0 0.0
        %1094 = vmatpush1.msra.mxu0 0.0
        %1095 = vmatprep.subr.mxu0 %v1063
        %1096 = vmatpush1.msra.mxu0 %v1060
        %1097 = vmatprep.subr.mxu0 0.0
        %1098 = vmatpush2.msra.mxu0 0.0
        %1099 = vmatprep.subr.mxu0 0.0
        %1100 = vmatpush2.msra.mxu0 0.0
        %1101 = vmatprep.subr.mxu0 0.0
        %1102 = vmatpush2.msra.mxu0 0.0
        %1103 = vmatprep.subr.mxu0 0.0
        %1104 = vmatpush2.msra.mxu0 0.0
        %1105 = vmatprep.subr.mxu0 0.0
        %1106 = vmatpush2.msra.mxu0 0.0
        %1107 = vmatprep.subr.mxu0 0.0
        %1108 = vmatpush2.msra.mxu0 0.0
        %1109 = vmatprep.subr.mxu0 0.0
        %1110 = vmatpush2.msra.mxu0 0.0
        %1111 = vmatprep.subr.mxu0 0.0
        %1112 = vmatpush2.msra.mxu0 0.0
        %1113 = vmatprep.subr.mxu0 0.0
        %1114 = vmatpush2.msra.mxu0 0.0
        %1115 = vmatprep.subr.mxu0 0.0
        %1116 = vmatpush2.msra.mxu0 0.0
        %1117 = vmatprep.subr.mxu0 0.0
        %1118 = vmatpush2.msra.mxu0 0.0
        %1119 = vmatprep.subr.mxu0 0.0
        %1120 = vmatpush2.msra.mxu0 0.0
        %1121 = vmatprep.subr.mxu0 0.0
        %1122 = vmatpush2.msra.mxu0 0.0
        %1123 = vmatprep.subr.mxu0 0.0
        %1124 = vmatpush2.msra.mxu0 0.0
        %1125 = vmatprep.subr.mxu0 0.0
        %1126 = vmatpush2.msra.mxu0 0.0
        %1127 = vmatprep.subr.mxu0 0.0
        %1128 = vmatpush2.msra.mxu0 0.0
        %1129 = vmatprep.mubr.f32.mxu0 0.0
        %1130 = vmatmul.mubr.f32.gmra.mxu0 %v1057
        %v1131 = vpop.f32.mrf.mxu0
        %v1132 = vadd.f32 0.0, %v1131
        %v1133 = vpop.f32.mrf.mxu0
        %v1134 = vadd.f32 0.0, %v1133
        %1135 = vdwg.mxu0
        %v1136 = vadd.f32 %v1032, %v1132
        %v1137 = vadd.f32 %v1033, %v1134
        %1138 = vrot.lane.b32.xlu0 %v304, 111
        %v1139 = vpop.permute.xlu0 %1138
        %1140 = vrot.lane.b32.xlu0 %v308, 111
        %v1141 = vpop.permute.xlu0 %1140
        %vm1142 = vcmp.lt.s32.totalorder %v315, 111
        %v1143 = vsel %vm1142, %v1139, %v1141
        %v1144 = vsel %vm1142, %v1141, %v1139
        %vm1145 = vmand %vm935, %vm536
        %v1146 = vsel %vm1145, 1, 0
        %v1147 = vlaneseq
        %v1148 = vshrl.u32 %v1147, 7
        %v1149 = vsub.s32 0, %v1148
        %v1150 = vrot.slane %v1146, %v1149
        %v1151 = vlaneseq
        %v1152 = vshrl.u32 %v1151, 7
        %v1153 = vsub.s32 1, %v1152
        %v1154 = vrot.slane %v1146, %v1153
        %vm1155 = vcmp.eq.s32.totalorder %v1150, 1
        %vm1156 = vcmp.eq.s32.totalorder %v1154, 1
        %v1157 = vsel %vm1155, %v1143, 0.0
        %v1158 = vsel %vm1156, %v1144, 0.0
        %s1159 = scalar_lea.vmem %s3, 32
        %v1160 = vld [vmem:[%s1159] sm:$0xf]
        %v1162 = vsel %vm364, %v1160, 0
        %v1165 = vsel %vm368, %v1157, 0
        %v1168 = vsel %vm368, %v1158, 0
        %1170 = vmatprep.subr.mxu0 0.0
        %1171 = vmatpush1.msra.mxu0 0.0
        %1172 = vmatprep.subr.mxu0 0.0
        %1173 = vmatpush1.msra.mxu0 0.0
        %1174 = vmatprep.subr.mxu0 0.0
        %1175 = vmatpush1.msra.mxu0 0.0
        %1176 = vmatprep.subr.mxu0 0.0
        %1177 = vmatpush1.msra.mxu0 0.0
        %1178 = vmatprep.subr.mxu0 0.0
        %1179 = vmatpush1.msra.mxu0 0.0
        %1180 = vmatprep.subr.mxu0 0.0
        %1181 = vmatpush1.msra.mxu0 0.0
        %1182 = vmatprep.subr.mxu0 0.0
        %1183 = vmatpush1.msra.mxu0 0.0
        %1184 = vmatprep.subr.mxu0 0.0
        %1185 = vmatpush1.msra.mxu0 0.0
        %1186 = vmatprep.subr.mxu0 0.0
        %1187 = vmatpush1.msra.mxu0 0.0
        %1188 = vmatprep.subr.mxu0 0.0
        %1189 = vmatpush1.msra.mxu0 0.0
        %1190 = vmatprep.subr.mxu0 0.0
        %1191 = vmatpush1.msra.mxu0 0.0
        %1192 = vmatprep.subr.mxu0 0.0
        %1193 = vmatpush1.msra.mxu0 0.0
        %1194 = vmatprep.subr.mxu0 0.0
        %1195 = vmatpush1.msra.mxu0 0.0
        %1196 = vmatprep.subr.mxu0 0.0
        %1197 = vmatpush1.msra.mxu0 0.0
        %1198 = vmatprep.subr.mxu0 0.0
        %1199 = vmatpush1.msra.mxu0 0.0
        %1200 = vmatprep.subr.mxu0 %v1168
        %1201 = vmatpush1.msra.mxu0 %v1165
        %1202 = vmatprep.subr.mxu0 0.0
        %1203 = vmatpush2.msra.mxu0 0.0
        %1204 = vmatprep.subr.mxu0 0.0
        %1205 = vmatpush2.msra.mxu0 0.0
        %1206 = vmatprep.subr.mxu0 0.0
        %1207 = vmatpush2.msra.mxu0 0.0
        %1208 = vmatprep.subr.mxu0 0.0
        %1209 = vmatpush2.msra.mxu0 0.0
        %1210 = vmatprep.subr.mxu0 0.0
        %1211 = vmatpush2.msra.mxu0 0.0
        %1212 = vmatprep.subr.mxu0 0.0
        %1213 = vmatpush2.msra.mxu0 0.0
        %1214 = vmatprep.subr.mxu0 0.0
        %1215 = vmatpush2.msra.mxu0 0.0
        %1216 = vmatprep.subr.mxu0 0.0
        %1217 = vmatpush2.msra.mxu0 0.0
        %1218 = vmatprep.subr.mxu0 0.0
        %1219 = vmatpush2.msra.mxu0 0.0
        %1220 = vmatprep.subr.mxu0 0.0
        %1221 = vmatpush2.msra.mxu0 0.0
        %1222 = vmatprep.subr.mxu0 0.0
        %1223 = vmatpush2.msra.mxu0 0.0
        %1224 = vmatprep.subr.mxu0 0.0
        %1225 = vmatpush2.msra.mxu0 0.0
        %1226 = vmatprep.subr.mxu0 0.0
        %1227 = vmatpush2.msra.mxu0 0.0
        %1228 = vmatprep.subr.mxu0 0.0
        %1229 = vmatpush2.msra.mxu0 0.0
        %1230 = vmatprep.subr.mxu0 0.0
        %1231 = vmatpush2.msra.mxu0 0.0
        %1232 = vmatprep.subr.mxu0 0.0
        %1233 = vmatpush2.msra.mxu0 0.0
        %1234 = vmatprep.mubr.f32.mxu0 0.0
        %1235 = vmatmul.mubr.f32.gmra.mxu0 %v1162
        %v1236 = vpop.f32.mrf.mxu0
        %v1237 = vadd.f32 0.0, %v1236
        %v1238 = vpop.f32.mrf.mxu0
        %v1239 = vadd.f32 0.0, %v1238
        %1240 = vdwg.mxu0
        %v1241 = vadd.f32 %v1136, %v1237
        %v1242 = vadd.f32 %v1137, %v1239
        %v1243 = vld [vmem:[%s4] sm:$0xf]
        %1245 = vset.pattern.permute.xlu0 0
        %1246 = vperm.xlu0 %1245, %v1243
        %v1247 = vpop.permute.xlu0 %1246
        %v1249 = vadd.f32 %v1241, %v1247
        %v1250 = vadd.f32 %v1242, %v1247
        %v1251 = vmul.f32 %v1249, 0.5
        %v1252 = vmul.f32 %v1250, 0.5
        %v1253 = vmul.f32 %v1249, 0.70710677
        %v1254 = vmul.f32 %v1250, 0.70710677
        %v1255 = verf.f32.pop %v1253
        %v1256 = verf.f32.pop %v1254
        %v1257 = vadd.f32 %v1255, 1.0
        %v1258 = vadd.f32 %v1256, 1.0
        %v1259 = vmul.f32 %v1251, %v1257
        %v1260 = vmul.f32 %v1252, %v1258
        %v1261 = vld [vmem:[%s5] sm:$0xff]
        %v1262 = vld [vmem:[%s6] sm:$0xff]
        %v1264 = vsel %vm364, %v1262, 0
        %v1267 = vsel %vm368, %v1259, 0
        %v1270 = vsel %vm368, %v1260, 0
        %1272 = vmatprep.subr.mxu0 0.0
        %1273 = vmatpush1.msra.mxu0 0.0
        %1274 = vmatprep.subr.mxu0 0.0
        %1275 = vmatpush1.msra.mxu0 0.0
        %1276 = vmatprep.subr.mxu0 0.0
        %1277 = vmatpush1.msra.mxu0 0.0
        %1278 = vmatprep.subr.mxu0 0.0
        %1279 = vmatpush1.msra.mxu0 0.0
        %1280 = vmatprep.subr.mxu0 0.0
        %1281 = vmatpush1.msra.mxu0 0.0
        %1282 = vmatprep.subr.mxu0 0.0
        %1283 = vmatpush1.msra.mxu0 0.0
        %1284 = vmatprep.subr.mxu0 0.0
        %1285 = vmatpush1.msra.mxu0 0.0
        %1286 = vmatprep.subr.mxu0 0.0
        %1287 = vmatpush1.msra.mxu0 0.0
        %1288 = vmatprep.subr.mxu0 0.0
        %1289 = vmatpush1.msra.mxu0 0.0
        %1290 = vmatprep.subr.mxu0 0.0
        %1291 = vmatpush1.msra.mxu0 0.0
        %1292 = vmatprep.subr.mxu0 0.0
        %1293 = vmatpush1.msra.mxu0 0.0
        %1294 = vmatprep.subr.mxu0 0.0
        %1295 = vmatpush1.msra.mxu0 0.0
        %1296 = vmatprep.subr.mxu0 0.0
        %1297 = vmatpush1.msra.mxu0 0.0
        %1298 = vmatprep.subr.mxu0 0.0
        %1299 = vmatpush1.msra.mxu0 0.0
        %1300 = vmatprep.subr.mxu0 0.0
        %1301 = vmatpush1.msra.mxu0 0.0
        %1302 = vmatprep.subr.mxu0 %v1270
        %1303 = vmatpush1.msra.mxu0 %v1267
        %1304 = vmatprep.subr.mxu0 0.0
        %1305 = vmatpush2.msra.mxu0 0.0
        %1306 = vmatprep.subr.mxu0 0.0
        %1307 = vmatpush2.msra.mxu0 0.0
        %1308 = vmatprep.subr.mxu0 0.0
        %1309 = vmatpush2.msra.mxu0 0.0
        %1310 = vmatprep.subr.mxu0 0.0
        %1311 = vmatpush2.msra.mxu0 0.0
        %1312 = vmatprep.subr.mxu0 0.0
        %1313 = vmatpush2.msra.mxu0 0.0
        %1314 = vmatprep.subr.mxu0 0.0
        %1315 = vmatpush2.msra.mxu0 0.0
        %1316 = vmatprep.subr.mxu0 0.0
        %1317 = vmatpush2.msra.mxu0 0.0
        %1318 = vmatprep.subr.mxu0 0.0
        %1319 = vmatpush2.msra.mxu0 0.0
        %1320 = vmatprep.subr.mxu0 0.0
        %1321 = vmatpush2.msra.mxu0 0.0
        %1322 = vmatprep.subr.mxu0 0.0
        %1323 = vmatpush2.msra.mxu0 0.0
        %1324 = vmatprep.subr.mxu0 0.0
        %1325 = vmatpush2.msra.mxu0 0.0
        %1326 = vmatprep.subr.mxu0 0.0
        %1327 = vmatpush2.msra.mxu0 0.0
        %1328 = vmatprep.subr.mxu0 0.0
        %1329 = vmatpush2.msra.mxu0 0.0
        %1330 = vmatprep.subr.mxu0 0.0
        %1331 = vmatpush2.msra.mxu0 0.0
        %1332 = vmatprep.subr.mxu0 0.0
        %1333 = vmatpush2.msra.mxu0 0.0
        %1334 = vmatprep.subr.mxu0 0.0
        %1335 = vmatpush2.msra.mxu0 0.0
        %1336 = vmatprep.mubr.f32.mxu0 0.0
        %1337 = vmatmul.mubr.f32.gmra.mxu0 %v1264
        %v1338 = vpop.f32.mrf.mxu0
        %v1339 = vadd.f32 0.0, %v1338
        %v1340 = vpop.f32.mrf.mxu0
        %v1341 = vadd.f32 0.0, %v1340
        %1342 = vdwg.mxu0
        %v1344 = vsel %vm364, %v1261, 0
        %1346 = vmatprep.subr.mxu0 0.0
        %1347 = vmatpush1.msra.mxu0 0.0
        %1348 = vmatprep.subr.mxu0 0.0
        %1349 = vmatpush1.msra.mxu0 0.0
        %1350 = vmatprep.subr.mxu0 0.0
        %1351 = vmatpush1.msra.mxu0 0.0
        %1352 = vmatprep.subr.mxu0 0.0
        %1353 = vmatpush1.msra.mxu0 0.0
        %1354 = vmatprep.subr.mxu0 0.0
        %1355 = vmatpush1.msra.mxu0 0.0
        %1356 = vmatprep.subr.mxu0 0.0
        %1357 = vmatpush1.msra.mxu0 0.0
        %1358 = vmatprep.subr.mxu0 0.0
        %1359 = vmatpush1.msra.mxu0 0.0
        %1360 = vmatprep.subr.mxu0 0.0
        %1361 = vmatpush1.msra.mxu0 0.0
        %1362 = vmatprep.subr.mxu0 0.0
        %1363 = vmatpush1.msra.mxu0 0.0
        %1364 = vmatprep.subr.mxu0 0.0
        %1365 = vmatpush1.msra.mxu0 0.0
        %1366 = vmatprep.subr.mxu0 0.0
        %1367 = vmatpush1.msra.mxu0 0.0
        %1368 = vmatprep.subr.mxu0 0.0
        %1369 = vmatpush1.msra.mxu0 0.0
        %1370 = vmatprep.subr.mxu0 0.0
        %1371 = vmatpush1.msra.mxu0 0.0
        %1372 = vmatprep.subr.mxu0 0.0
        %1373 = vmatpush1.msra.mxu0 0.0
        %1374 = vmatprep.subr.mxu0 0.0
        %1375 = vmatpush1.msra.mxu0 0.0
        %1376 = vmatprep.subr.mxu0 %v746
        %1377 = vmatpush1.msra.mxu0 %v744
        %1378 = vmatprep.subr.mxu0 0.0
        %1379 = vmatpush2.msra.mxu0 0.0
        %1380 = vmatprep.subr.mxu0 0.0
        %1381 = vmatpush2.msra.mxu0 0.0
        %1382 = vmatprep.subr.mxu0 0.0
        %1383 = vmatpush2.msra.mxu0 0.0
        %1384 = vmatprep.subr.mxu0 0.0
        %1385 = vmatpush2.msra.mxu0 0.0
        %1386 = vmatprep.subr.mxu0 0.0
        %1387 = vmatpush2.msra.mxu0 0.0
        %1388 = vmatprep.subr.mxu0 0.0
        %1389 = vmatpush2.msra.mxu0 0.0
        %1390 = vmatprep.subr.mxu0 0.0
        %1391 = vmatpush2.msra.mxu0 0.0
        %1392 = vmatprep.subr.mxu0 0.0
        %1393 = vmatpush2.msra.mxu0 0.0
        %1394 = vmatprep.subr.mxu0 0.0
        %1395 = vmatpush2.msra.mxu0 0.0
        %1396 = vmatprep.subr.mxu0 0.0
        %1397 = vmatpush2.msra.mxu0 0.0
        %1398 = vmatprep.subr.mxu0 0.0
        %1399 = vmatpush2.msra.mxu0 0.0
        %1400 = vmatprep.subr.mxu0 0.0
        %1401 = vmatpush2.msra.mxu0 0.0
        %1402 = vmatprep.subr.mxu0 0.0
        %1403 = vmatpush2.msra.mxu0 0.0
        %1404 = vmatprep.subr.mxu0 0.0
        %1405 = vmatpush2.msra.mxu0 0.0
        %1406 = vmatprep.subr.mxu0 0.0
        %1407 = vmatpush2.msra.mxu0 0.0
        %1408 = vmatprep.subr.mxu0 0.0
        %1409 = vmatpush2.msra.mxu0 0.0
        %1410 = vmatprep.mubr.f32.mxu0 0.0
        %1411 = vmatmul.mubr.f32.gmra.mxu0 %v1344
        %v1412 = vpop.f32.mrf.mxu0
        %v1413 = vadd.f32 %v1339, %v1412
        %v1414 = vpop.f32.mrf.mxu0
        %v1415 = vadd.f32 %v1341, %v1414
        %1416 = vdwg.mxu0
        %v1417 = vld [vmem:[%s7] sm:$0xff]
        %1419 = vset.pattern.permute.xlu0 0
        %1420 = vperm.xlu0 %1419, %v1417
        %v1421 = vpop.permute.xlu0 %1420
        %v1423 = vadd.f32 %v1413, %v1421
        %v1424 = vadd.f32 %v1415, %v1421
        %v1425 = vmul.f32 %v1423, 0.5
        %v1426 = vmul.f32 %v1424, 0.5
        %v1427 = vmul.f32 %v1423, 0.70710677
        %v1428 = vmul.f32 %v1424, 0.70710677
        %v1429 = verf.f32.pop %v1427
        %v1430 = verf.f32.pop %v1428
        %v1431 = vadd.f32 %v1429, 1.0
        %v1432 = vadd.f32 %v1430, 1.0
        %v1433 = vmul.f32 %v1425, %v1431
        %v1434 = vmul.f32 %v1426, %v1432
        %1435 = vst [vmem:[%s298] sm:$0xff] %v1433
        %1436 = vst [vmem:[%s298 + $0x8] sm:$0xff] %v1434
        %s1437 = sand.u32 %s203, 1
        %s1438 = scalar_lea.sflag [#allocation3], %s1437
        %s1439 = sand.u32 %s203, 1
        %s1440 = smul.addr %s1439, 16
        %s1441 = scalar_lea.vmem [#allocation2], %s1440
        // Predicated region
        $region53: #{tpu_custom_call.1} parent=51 // pred_check
          %p1442 = pneg %p213
        $region54: #{tpu_custom_call.1} parent=51 // pred_check_branch
          %1444 = sbr.rel (%p1442) target = $region56
        $region55: #{tpu_custom_call.1} parent=51 // pred_region
          %s1446 = ssub.s32 256, 256
          %1447 = vsyncadd %s1438, %s1446
          %s1448 = smul.addr %s22, 2
          %s1449 = smul.addr %s1448, 128
          %s1450 = scalar_lea.hbm %s8, %s1449
          %s1452 = sshll.u32 %s1441, 4
          %s1453 = int_to_ptr.vmem [resolvable:$true] %s1452
          %1455 = dma.vmem_to_hbm [thread:$0]  %s1453, 256, %s1450, %s1438
        $region56: #{tpu_custom_call.1} parent=51 // pred_fallthru
          _
      $region52: #{tpu_custom_call.1} parent=5 // pred_fallthru
        _
      %p1456 = scmp.le.s32.totalorder 2, %s17
      // Predicated region
      $region57: #{tpu_custom_call.1} parent=5 // pred_check
        %p1457 = pneg %p1456
      $region58: #{tpu_custom_call.1} parent=5 // pred_check_branch
        %1459 = sbr.rel (%p1457) target = $region60
      $region59: #{tpu_custom_call.1} parent=5 // pred_region
        %s1460 = ssub.s32 %s17, 2
        // Predicated region
        $region61: #{tpu_custom_call.1} parent=59 // pred_check
          %p1461 = pneg %p219
        $region62: #{tpu_custom_call.1} parent=59 // pred_check_branch
          %1463 = sbr.rel (%p1461) target = $region64
        $region63: #{tpu_custom_call.1} parent=59 // pred_region
          %s1464 = sand.u32 %s204, 1
          %s1465 = scalar_lea.sflag [#allocation3], %s1464
          %s1466 = sand.u32 %s204, 1
          %s1467 = smul.addr %s1466, 16
          %s1468 = scalar_lea.vmem [#allocation2], %s1467
          %1469 = dma.done %s1465, 256
        $region64: #{tpu_custom_call.1} parent=59 // pred_fallthru
          _
      $region60: #{tpu_custom_call.1} parent=5 // pred_fallthru
        _
    $region6: #{tpu_custom_call.1} parent=1 // loop_footer
      %s21 = sadd.s32 1, %s17
    $region7: #{tpu_custom_call.1} parent=1 // loop_footer_branch
      %16 = sbr.rel target = $region3
    $region8: #{tpu_custom_call.1} parent=1 // loop_exit
      _
    %1470 = vsyncpa [#allocation3], 1
    %s1471 = scalar_lea.sflag [#allocation3], 1
    %1472 = vsyncpa %s1471, 1

</llo_original>
